<compile_context>
chip_gen: v7x
topology: tpu7x:2x2x1
jax: 0.10.0
libtpu: 0.0.40
codegen_flags: <defaults>
</compile_context>

<pallas_src>
import jax
import jax.numpy as jnp
from jax.experimental import pallas as pl
from jax.experimental.pallas import tpu as pltpu


def _lrelu(v, alpha=0.2):
    return jnp.where(v > 0, v, alpha * v)


def gcn_kernel(x_ref, w_adj_t_ref, w_gw_ref, w_cg_ref, w_sw_ref,
               w_cm_g_ref, w_cm_x_ref, bias_ref, b_cm_ref, *out_refs):
    f32, bf16 = jnp.float32, jnp.bfloat16
    BB = x_ref.shape[0]

    # Grid-invariant weights (bf16), loaded once per grid step.
    w_adj_t = w_adj_t_ref[...]          # (N, N)   general_adj weight, pre-transposed
    w_gw = w_gw_ref[...]                # (Cout, C)
    w_cg = w_cg_ref[...]                # (C, C)   eval-mode BN folded in
    w_sw = w_sw_ref[...]                # (Cout, C)
    w_cm_g = w_cm_g_ref[...]            # (N, C)   conv_create_co_mat, global half
    w_cm_x = w_cm_x_ref[...]            # (N, C)   conv_create_co_mat, x half
    b_gw = bias_ref[:, 0:1]             # (Cout, 1) packed f32 biases
    b_cg = bias_ref[:, 1:2]
    b_sw = bias_ref[:, 2:3]
    b_cm = b_cm_ref[...]                # (N, 1)   f32

    write_adj = len(out_refs) == 2

    # Per-batch matmuls on shared weights (unrolled at trace time); no
    # (BB*N, BB*N) block-diagonal temporaries anywhere.
    for b in range(BB):
        x_b = x_ref[b]                                           # (C, N) bf16
        x_f = x_b.astype(f32)

        # ---- forward_general_gcn ----
        t1 = _lrelu(jnp.dot(x_b, w_adj_t, preferred_element_type=f32))       # (C, N)
        og = _lrelu(jnp.dot(w_gw, t1.astype(bf16),
                            preferred_element_type=f32) + b_gw)              # (C, N)
        x2 = x_f + og                                                         # residual
        x2b = x2.astype(bf16)

        # ---- forward_construct_specific_graph ----
        x_glb = jnp.mean(x2, axis=1, keepdims=True)                           # (C, 1)
        g = _lrelu(jnp.dot(w_cg, x_glb.astype(bf16),
                           preferred_element_type=f32) + b_cg)                # (C, 1)
        col = jnp.dot(w_cm_g, g.astype(bf16),
                      preferred_element_type=f32) + b_cm                      # (N, 1)
        z = jnp.dot(w_cm_x, x2b, preferred_element_type=f32) + col            # (N, N)
        adj = pl.reciprocal(1.0 + jnp.exp(-z), approx=True)                   # sigmoid
        if write_adj:
            out_refs[1][b] = adj.astype(out_refs[1].dtype)

        # ---- forward_specific_gcn ----
        x3 = _lrelu(jnp.dot(x2b, adj.astype(bf16),
                            preferred_element_type=f32))                      # (C, N)
        out = _lrelu(jnp.dot(w_sw, x3.astype(bf16),
                             preferred_element_type=f32) + b_sw)              # (Cout, N)
        out_refs[0][b] = out.astype(out_refs[0].dtype)


def _choose_bb(B, N, target_lanes=512):
    """Batches folded per grid step: big enough to amortize the ~0.35us
    per-step pipeline overhead, small enough to keep >= 2 grid steps (both
    v7x TensorCores busy).  Prefers divisors of B (no batch-padding pass)."""
    tgt = max(1, target_lanes // max(N, 1))
    if B >= 2:
        tgt = min(tgt, (B + 1) // 2)          # guarantee G >= 2 when possible
    tgt = max(1, min(tgt, B))
    best_div = next(bb for bb in range(tgt, 0, -1) if B % bb == 0)
    if 2 * best_div >= tgt:                   # close enough to target: no padding
        return best_div, B
    Bp = -(-B // tgt) * tgt                   # otherwise pad batch (one extra pass)
    return tgt, Bp


def graph_convolution(x, params, *, return_adj=False, target_lanes=512):
    B, C, N = x.shape
    Cout = params["w_sw"].shape[0]
    assert Cout == C, "residual x + out_general requires out_features == in_features"
    f32, bf16 = jnp.float32, jnp.bfloat16

    BB, Bp = _choose_bb(B, N, target_lanes)
    G = Bp // BB

    xin = x
    if Bp != B:
        xin = jnp.concatenate([x, jnp.zeros((Bp - B, C, N), x.dtype)], axis=0)
    xin = xin.astype(bf16)                    # bf16 MXU operand; halves HBM traffic

    # Fold eval-mode BatchNorm into conv_global.
    bn_scale = params["bn_scale"].astype(f32)
    bn_shift = params["bn_shift"].astype(f32)
    w_cg = (params["w_cg"].astype(f32) * bn_scale[:, None]).astype(bf16)
    b_cg = params["b_cg"].astype(f32) * bn_scale + bn_shift

    # Split conv_create_co_mat weight: global (rank-1) half and x half (no concat).
    w_cm = params["w_cm"].astype(f32)
    w_cm_g = w_cm[:, :C].astype(bf16)
    w_cm_x = w_cm[:, C:].astype(bf16)

    w_adj_t = params["w_adj"].astype(f32).T.astype(bf16)     # pre-transposed (N, N)
    w_gw = params["w_gw"].astype(bf16)
    w_sw = params["w_sw"].astype(bf16)

    bias_c = jnp.stack([params["b_gw"].astype(f32), b_cg,
                        params["b_sw"].astype(f32)], axis=1)  # (C, 3) f32
    b_cm = params["b_cm"].astype(f32).reshape(N, 1)

    const2 = lambda r, c: pl.BlockSpec((r, c), lambda g: (0, 0))
    in_specs = [
        pl.BlockSpec((BB, C, N), lambda g: (g, 0, 0)),   # x, original layout
        const2(N, N),                                    # w_adj^T
        const2(Cout, C),                                 # w_gw
        const2(C, C),                                    # w_cg (BN folded)
        const2(Cout, C),                                 # w_sw
        const2(N, C),                                    # w_cm global half
        const2(N, C),                                    # w_cm x half
        const2(C, 3),                                    # packed f32 biases
        const2(N, 1),                                    # b_cm
    ]
    out_specs = [pl.BlockSpec((BB, Cout, N), lambda g: (g, 0, 0))]
    out_shape = [jax.ShapeDtypeStruct((Bp, Cout, N), f32)]
    if return_adj:
        out_specs.append(pl.BlockSpec((BB, N, N), lambda g: (g, 0, 0)))
        out_shape.append(jax.ShapeDtypeStruct((Bp, N, N), f32))

    res = pl.pallas_call(
        gcn_kernel,
        grid=(G,),
        in_specs=in_specs,
        out_specs=out_specs,
        out_shape=out_shape,
        compiler_params=pltpu.CompilerParams(
            dimension_semantics=("parallel",)),
    )(xin, w_adj_t, w_gw, w_cg, w_sw, w_cm_g, w_cm_x, bias_c, b_cm)

    out = res[0][:B]
    if return_adj:
        return out, res[1][:B]
    return out


def reference(x, p):
    """Pure-JAX f32 reference of the PyTorch forward (eval-mode BN)."""
    B, C, N = x.shape
    xT = jnp.swapaxes(x, 1, 2)                                        # (B,N,C)
    t1 = _lrelu(jnp.einsum("oi,bic->boc", p["w_adj"], xT))            # (B,N,C)
    out_gen = _lrelu(jnp.einsum("oi,bin->bon", p["w_gw"],
                                jnp.swapaxes(t1, 1, 2))
                     + p["b_gw"][None, :, None])                      # (B,C,N)
    x2 = x + out_gen
    x_glb = jnp.mean(x2, axis=2, keepdims=True)                       # (B,C,1)
    g = jnp.einsum("oi,bil->bol", p["w_cg"], x_glb) + p["b_cg"][None, :, None]
    g = g * p["bn_scale"][None, :, None] + p["bn_shift"][None, :, None]
    g = _lrelu(g)
    g = jnp.broadcast_to(g, (B, C, N))
    cat = jnp.concatenate([g, x2], axis=1)                            # (B,2C,N)
    adj = jax.nn.sigmoid(jnp.einsum("ok,bkn->bon", p["w_cm"], cat)
                         + p["b_cm"][None, :, None])                  # (B,N,N)
    x3 = _lrelu(jnp.matmul(x2, adj))                                  # (B,C,N)
    out = _lrelu(jnp.einsum("oi,bin->bon", p["w_sw"], x3)
                 + p["b_sw"][None, :, None])
    return out, adj


def init_params(key, in_features, out_features, num_nodes):
    ks = jax.random.split(key, 13)
    u = lambda k, shape, s=0.1: jax.random.uniform(k, shape, jnp.float32, -s, s)
    eps = 1e-5
    gamma = 1.0 + u(ks[9], (in_features,))
    beta = u(ks[10], (in_features,))
    running_mean = u(ks[11], (in_features,))
    running_var = 1.0 + jnp.abs(u(ks[12], (in_features,)))
    bn_scale = gamma / jnp.sqrt(running_var + eps)
    bn_shift = beta - running_mean * bn_scale
    return {
        # Conv1d(num_nodes, num_nodes, 1, bias=False): weight (N, N, 1) -> (N, N)
        "w_adj": u(ks[0], (num_nodes, num_nodes)),
        # Conv1d(in_features, out_features, 1)
        "w_gw": u(ks[1], (out_features, in_features)),
        "b_gw": u(ks[2], (out_features,)),
        # Conv1d(in_features, in_features, 1)
        "w_cg": u(ks[3], (in_features, in_features)),
        "b_cg": u(ks[4], (in_features,)),
        # BatchNorm1d (eval mode, folded in the wrapper)
        "bn_scale": bn_scale,
        "bn_shift": bn_shift,
        # Conv1d(2*in_features, num_nodes, 1)
        "w_cm": u(ks[5], (num_nodes, 2 * in_features)),
        "b_cm": u(ks[6], (num_nodes,)),
        # Conv1d(in_features, out_features, 1)
        "w_sw": u(ks[7], (out_features, in_features)),
        "b_sw": u(ks[8], (out_features,)),
    }


if __name__ == "__main__":
    B = 10                  # -> BB=5 batches per step, G=2 grid steps, no padding
    in_features = 8         # C (out_features must equal in_features: residual)
    out_features = 8
    num_nodes = 16          # N = end

    key = jax.random.PRNGKey(0)
    kx, kp = jax.random.split(key)
    x = jax.random.normal(kx, (B, in_features, num_nodes), jnp.float32)
    params = init_params(kp, in_features, out_features, num_nodes)

    # Optimized default path: no specific_adj HBM writeback (matches forward()'s return).
    out = jax.block_until_ready(graph_convolution(x, params))
    # Path with the optional specific_adj output, for validation.
    out2, adj = graph_convolution(x, params, return_adj=True)
    out2 = jax.block_until_ready(out2)
    adj = jax.block_until_ready(adj)

    ref_out, ref_adj = reference(x, params)
    assert out.shape == (B, out_features, num_nodes)
    assert adj.shape == (B, num_nodes, num_nodes)
    # bf16 MXU operands + approx reciprocal -> relaxed tolerances vs f32 ref.
    assert jnp.allclose(out, ref_out, atol=6e-2, rtol=6e-2)
    assert jnp.allclose(out2, ref_out, atol=6e-2, rtol=6e-2)
    assert jnp.allclose(adj, ref_adj, atol=1.5e-2, rtol=1.5e-2)

    print("KERNEL_OK")
</pallas_src>

<mosaic_0001>
module attributes {stable_mosaic.version = 11 : i64} {
  func.func @gcn_kernel(%arg0: i32, %arg1: memref<5x8x16xbf16, #tpu.memory_space<vmem>>, %arg2: memref<16x16xbf16, #tpu.memory_space<vmem>>, %arg3: memref<8x8xbf16, #tpu.memory_space<vmem>>, %arg4: memref<8x8xbf16, #tpu.memory_space<vmem>>, %arg5: memref<8x8xbf16, #tpu.memory_space<vmem>>, %arg6: memref<16x8xbf16, #tpu.memory_space<vmem>>, %arg7: memref<16x8xbf16, #tpu.memory_space<vmem>>, %arg8: memref<8x3xf32, #tpu.memory_space<vmem>>, %arg9: memref<16x1xf32, #tpu.memory_space<vmem>>, %arg10: memref<5x8x16xf32, #tpu.memory_space<vmem>>) attributes {dimension_semantics = [#tpu.dimension_semantics<parallel>], iteration_bounds = array<i64: 2>, scalar_prefetch = 0 : i64, scratch_operands = 0 : i64, tpu.core_type = #tpu.core_type<tc>, window_params = [{transform_indices = @transform_0, window_bounds = array<i64: 5, 8, 16>}, {pipeline_mode = #tpu.pipeline_mode<synchronous>, transform_indices = @transform_1, window_bounds = array<i64: 16, 16>}, {pipeline_mode = #tpu.pipeline_mode<synchronous>, transform_indices = @transform_2, window_bounds = array<i64: 8, 8>}, {pipeline_mode = #tpu.pipeline_mode<synchronous>, transform_indices = @transform_3, window_bounds = array<i64: 8, 8>}, {pipeline_mode = #tpu.pipeline_mode<synchronous>, transform_indices = @transform_4, window_bounds = array<i64: 8, 8>}, {pipeline_mode = #tpu.pipeline_mode<synchronous>, transform_indices = @transform_5, window_bounds = array<i64: 16, 8>}, {pipeline_mode = #tpu.pipeline_mode<synchronous>, transform_indices = @transform_6, window_bounds = array<i64: 16, 8>}, {pipeline_mode = #tpu.pipeline_mode<synchronous>, transform_indices = @transform_7, window_bounds = array<i64: 8, 3>}, {pipeline_mode = #tpu.pipeline_mode<synchronous>, transform_indices = @transform_8, window_bounds = array<i64: 16, 1>}, {transform_indices = @transform_9, window_bounds = array<i64: 5, 8, 16>}]} {
    %c0 = arith.constant 0 : index
    %c0_0 = arith.constant 0 : index
    %0 = vector.load %arg2[%c0, %c0_0] : memref<16x16xbf16, #tpu.memory_space<vmem>>, vector<16x16xbf16>
    %c0_1 = arith.constant 0 : index
    %c0_2 = arith.constant 0 : index
    %1 = vector.load %arg3[%c0_1, %c0_2] : memref<8x8xbf16, #tpu.memory_space<vmem>>, vector<8x8xbf16>
    %c0_3 = arith.constant 0 : index
    %c0_4 = arith.constant 0 : index
    %2 = vector.load %arg4[%c0_3, %c0_4] : memref<8x8xbf16, #tpu.memory_space<vmem>>, vector<8x8xbf16>
    %c0_5 = arith.constant 0 : index
    %c0_6 = arith.constant 0 : index
    %3 = vector.load %arg5[%c0_5, %c0_6] : memref<8x8xbf16, #tpu.memory_space<vmem>>, vector<8x8xbf16>
    %c0_7 = arith.constant 0 : index
    %c0_8 = arith.constant 0 : index
    %4 = vector.load %arg6[%c0_7, %c0_8] : memref<16x8xbf16, #tpu.memory_space<vmem>>, vector<16x8xbf16>
    %c0_9 = arith.constant 0 : index
    %c0_10 = arith.constant 0 : index
    %5 = vector.load %arg7[%c0_9, %c0_10] : memref<16x8xbf16, #tpu.memory_space<vmem>>, vector<16x8xbf16>
    %c0_11 = arith.constant 0 : index
    %c0_12 = arith.constant 0 : index
    %6 = vector.load %arg8[%c0_11, %c0_12] : memref<8x3xf32, #tpu.memory_space<vmem>>, vector<8x1xf32>
    %c0_13 = arith.constant 0 : index
    %c1 = arith.constant 1 : index
    %7 = vector.load %arg8[%c0_13, %c1] : memref<8x3xf32, #tpu.memory_space<vmem>>, vector<8x1xf32>
    %c0_14 = arith.constant 0 : index
    %c2 = arith.constant 2 : index
    %8 = vector.load %arg8[%c0_14, %c2] : memref<8x3xf32, #tpu.memory_space<vmem>>, vector<8x1xf32>
    %c0_15 = arith.constant 0 : index
    %c0_16 = arith.constant 0 : index
    %9 = vector.load %arg9[%c0_15, %c0_16] : memref<16x1xf32, #tpu.memory_space<vmem>>, vector<16x1xf32>
    %c0_17 = arith.constant 0 : index
    %c0_18 = arith.constant 0 : index
    %c0_19 = arith.constant 0 : index
    %10 = vector.load %arg1[%c0_17, %c0_18, %c0_19] : memref<5x8x16xbf16, #tpu.memory_space<vmem>>, vector<1x8x16xbf16>
    %11 = vector.shape_cast %10 : vector<1x8x16xbf16> to vector<8x16xbf16>
    %12 = arith.extf %11 : vector<8x16xbf16> to vector<8x16xf32>
    %cst = arith.constant dense<0.000000e+00> : vector<8x16xf32>
    %13 = tpu.matmul %11, %0, %cst {dimension_numbers = #tpu.dot_dimension_numbers<[1], [0], [0], [1], [0, 0, 1, 1], [], []>} : vector<8x16xbf16>, vector<16x16xbf16>, vector<8x16xf32> -> vector<8x16xf32>
    %cst_20 = arith.constant 0.000000e+00 : f32
    %14 = vector.broadcast %cst_20 : f32 to vector<8x16xf32>
    %15 = arith.cmpf ogt, %13, %14 : vector<8x16xf32>
    %cst_21 = arith.constant 2.000000e-01 : f32
    %16 = vector.broadcast %cst_21 : f32 to vector<8x16xf32>
    %17 = arith.mulf %16, %13 : vector<8x16xf32>
    %18 = arith.select %15, %13, %17 : vector<8x16xi1>, vector<8x16xf32>
    %19 = arith.truncf %18 : vector<8x16xf32> to vector<8x16xbf16>
    %cst_22 = arith.constant dense<0.000000e+00> : vector<8x16xf32>
    %20 = tpu.matmul %1, %19, %cst_22 {dimension_numbers = #tpu.dot_dimension_numbers<[1], [0], [0], [1], [0, 0, 1, 1], [], []>} : vector<8x8xbf16>, vector<8x16xbf16>, vector<8x16xf32> -> vector<8x16xf32>
    %21 = vector.broadcast %6 : vector<8x1xf32> to vector<8x16xf32>
    %22 = arith.addf %20, %21 : vector<8x16xf32>
    %cst_23 = arith.constant 0.000000e+00 : f32
    %23 = vector.broadcast %cst_23 : f32 to vector<8x16xf32>
    %24 = arith.cmpf ogt, %22, %23 : vector<8x16xf32>
    %cst_24 = arith.constant 2.000000e-01 : f32
    %25 = vector.broadcast %cst_24 : f32 to vector<8x16xf32>
    %26 = arith.mulf %25, %22 : vector<8x16xf32>
    %27 = arith.select %24, %22, %26 : vector<8x16xi1>, vector<8x16xf32>
    %28 = arith.addf %12, %27 : vector<8x16xf32>
    %29 = arith.truncf %28 : vector<8x16xf32> to vector<8x16xbf16>
    %cst_25 = arith.constant dense<0.000000e+00> : vector<8xf32>
    %30 = vector.multi_reduction <add>, %28, %cst_25 [1] : vector<8x16xf32> to vector<8xf32>
    %31 = vector.shape_cast %30 : vector<8xf32> to vector<8x1xf32>
    %cst_26 = arith.constant 1.600000e+01 : f32
    %32 = vector.broadcast %cst_26 : f32 to vector<8x1xf32>
    %33 = arith.divf %31, %32 : vector<8x1xf32>
    %34 = arith.truncf %33 : vector<8x1xf32> to vector<8x1xbf16>
    %cst_27 = arith.constant dense<0.000000e+00> : vector<8x1xf32>
    %35 = tpu.matmul %2, %34, %cst_27 {dimension_numbers = #tpu.dot_dimension_numbers<[1], [0], [0], [1], [0, 0, 1, 1], [], []>} : vector<8x8xbf16>, vector<8x1xbf16>, vector<8x1xf32> -> vector<8x1xf32>
    %36 = arith.addf %35, %7 : vector<8x1xf32>
    %cst_28 = arith.constant 0.000000e+00 : f32
    %37 = vector.broadcast %cst_28 : f32 to vector<8x1xf32>
    %38 = arith.cmpf ogt, %36, %37 : vector<8x1xf32>
    %cst_29 = arith.constant 2.000000e-01 : f32
    %39 = vector.broadcast %cst_29 : f32 to vector<8x1xf32>
    %40 = arith.mulf %39, %36 : vector<8x1xf32>
    %41 = arith.select %38, %36, %40 : vector<8x1xi1>, vector<8x1xf32>
    %42 = arith.truncf %41 : vector<8x1xf32> to vector<8x1xbf16>
    %cst_30 = arith.constant dense<0.000000e+00> : vector<16x1xf32>
    %43 = tpu.matmul %4, %42, %cst_30 {dimension_numbers = #tpu.dot_dimension_numbers<[1], [0], [0], [1], [0, 0, 1, 1], [], []>} : vector<16x8xbf16>, vector<8x1xbf16>, vector<16x1xf32> -> vector<16x1xf32>
    %44 = arith.addf %43, %9 : vector<16x1xf32>
    %cst_31 = arith.constant dense<0.000000e+00> : vector<16x16xf32>
    %45 = tpu.matmul %5, %29, %cst_31 {dimension_numbers = #tpu.dot_dimension_numbers<[1], [0], [0], [1], [0, 0, 1, 1], [], []>} : vector<16x8xbf16>, vector<8x16xbf16>, vector<16x16xf32> -> vector<16x16xf32>
    %46 = vector.broadcast %44 : vector<16x1xf32> to vector<16x16xf32>
    %47 = arith.addf %45, %46 : vector<16x16xf32>
    %cst_32 = arith.constant 0.000000e+00 : f32
    %48 = vector.broadcast %cst_32 : f32 to vector<16x16xf32>
    %49 = arith.subf %48, %47 : vector<16x16xf32>
    %50 = math.exp %49 : vector<16x16xf32>
    %cst_33 = arith.constant 1.000000e+00 : f32
    %51 = vector.broadcast %cst_33 : f32 to vector<16x16xf32>
    %52 = arith.addf %51, %50 : vector<16x16xf32>
    %53 = tpu.reciprocal %52 {approx = true} : vector<16x16xf32> -> vector<16x16xf32>
    %54 = arith.truncf %53 : vector<16x16xf32> to vector<16x16xbf16>
    %cst_34 = arith.constant dense<0.000000e+00> : vector<8x16xf32>
    %55 = tpu.matmul %29, %54, %cst_34 {dimension_numbers = #tpu.dot_dimension_numbers<[1], [0], [0], [1], [0, 0, 1, 1], [], []>} : vector<8x16xbf16>, vector<16x16xbf16>, vector<8x16xf32> -> vector<8x16xf32>
    %cst_35 = arith.constant 0.000000e+00 : f32
    %56 = vector.broadcast %cst_35 : f32 to vector<8x16xf32>
    %57 = arith.cmpf ogt, %55, %56 : vector<8x16xf32>
    %cst_36 = arith.constant 2.000000e-01 : f32
    %58 = vector.broadcast %cst_36 : f32 to vector<8x16xf32>
    %59 = arith.mulf %58, %55 : vector<8x16xf32>
    %60 = arith.select %57, %55, %59 : vector<8x16xi1>, vector<8x16xf32>
    %61 = arith.truncf %60 : vector<8x16xf32> to vector<8x16xbf16>
    %cst_37 = arith.constant dense<0.000000e+00> : vector<8x16xf32>
    %62 = tpu.matmul %3, %61, %cst_37 {dimension_numbers = #tpu.dot_dimension_numbers<[1], [0], [0], [1], [0, 0, 1, 1], [], []>} : vector<8x8xbf16>, vector<8x16xbf16>, vector<8x16xf32> -> vector<8x16xf32>
    %63 = vector.broadcast %8 : vector<8x1xf32> to vector<8x16xf32>
    %64 = arith.addf %62, %63 : vector<8x16xf32>
    %cst_38 = arith.constant 0.000000e+00 : f32
    %65 = vector.broadcast %cst_38 : f32 to vector<8x16xf32>
    %66 = arith.cmpf ogt, %64, %65 : vector<8x16xf32>
    %cst_39 = arith.constant 2.000000e-01 : f32
    %67 = vector.broadcast %cst_39 : f32 to vector<8x16xf32>
    %68 = arith.mulf %67, %64 : vector<8x16xf32>
    %69 = arith.select %66, %64, %68 : vector<8x16xi1>, vector<8x16xf32>
    %c0_40 = arith.constant 0 : index
    %c0_41 = arith.constant 0 : index
    %c0_42 = arith.constant 0 : index
    %70 = vector.load %arg10[%c0_40, %c0_41, %c0_42] : memref<5x8x16xf32, #tpu.memory_space<vmem>>, vector<1x8x16xf32>
    %71 = vector.shape_cast %70 : vector<1x8x16xf32> to vector<8x16xf32>
    %72 = vector.shape_cast %69 : vector<8x16xf32> to vector<1x8x16xf32>
    tpu.vector_store %arg10[%c0_40, %c0_41, %c0_42], %72 {strides = array<i32>} : memref<5x8x16xf32, #tpu.memory_space<vmem>>, vector<1x8x16xf32>,
    %c1_43 = arith.constant 1 : index
    %c0_44 = arith.constant 0 : index
    %c0_45 = arith.constant 0 : index
    %73 = vector.load %arg1[%c1_43, %c0_44, %c0_45] : memref<5x8x16xbf16, #tpu.memory_space<vmem>>, vector<1x8x16xbf16>
    %74 = vector.shape_cast %73 : vector<1x8x16xbf16> to vector<8x16xbf16>
    %75 = arith.extf %74 : vector<8x16xbf16> to vector<8x16xf32>
    %cst_46 = arith.constant dense<0.000000e+00> : vector<8x16xf32>
    %76 = tpu.matmul %74, %0, %cst_46 {dimension_numbers = #tpu.dot_dimension_numbers<[1], [0], [0], [1], [0, 0, 1, 1], [], []>} : vector<8x16xbf16>, vector<16x16xbf16>, vector<8x16xf32> -> vector<8x16xf32>
    %cst_47 = arith.constant 0.000000e+00 : f32
    %77 = vector.broadcast %cst_47 : f32 to vector<8x16xf32>
    %78 = arith.cmpf ogt, %76, %77 : vector<8x16xf32>
    %cst_48 = arith.constant 2.000000e-01 : f32
    %79 = vector.broadcast %cst_48 : f32 to vector<8x16xf32>
    %80 = arith.mulf %79, %76 : vector<8x16xf32>
    %81 = arith.select %78, %76, %80 : vector<8x16xi1>, vector<8x16xf32>
    %82 = arith.truncf %81 : vector<8x16xf32> to vector<8x16xbf16>
    %cst_49 = arith.constant dense<0.000000e+00> : vector<8x16xf32>
    %83 = tpu.matmul %1, %82, %cst_49 {dimension_numbers = #tpu.dot_dimension_numbers<[1], [0], [0], [1], [0, 0, 1, 1], [], []>} : vector<8x8xbf16>, vector<8x16xbf16>, vector<8x16xf32> -> vector<8x16xf32>
    %84 = vector.broadcast %6 : vector<8x1xf32> to vector<8x16xf32>
    %85 = arith.addf %83, %84 : vector<8x16xf32>
    %cst_50 = arith.constant 0.000000e+00 : f32
    %86 = vector.broadcast %cst_50 : f32 to vector<8x16xf32>
    %87 = arith.cmpf ogt, %85, %86 : vector<8x16xf32>
    %cst_51 = arith.constant 2.000000e-01 : f32
    %88 = vector.broadcast %cst_51 : f32 to vector<8x16xf32>
    %89 = arith.mulf %88, %85 : vector<8x16xf32>
    %90 = arith.select %87, %85, %89 : vector<8x16xi1>, vector<8x16xf32>
    %91 = arith.addf %75, %90 : vector<8x16xf32>
    %92 = arith.truncf %91 : vector<8x16xf32> to vector<8x16xbf16>
    %cst_52 = arith.constant dense<0.000000e+00> : vector<8xf32>
    %93 = vector.multi_reduction <add>, %91, %cst_52 [1] : vector<8x16xf32> to vector<8xf32>
    %94 = vector.shape_cast %93 : vector<8xf32> to vector<8x1xf32>
    %cst_53 = arith.constant 1.600000e+01 : f32
    %95 = vector.broadcast %cst_53 : f32 to vector<8x1xf32>
    %96 = arith.divf %94, %95 : vector<8x1xf32>
    %97 = arith.truncf %96 : vector<8x1xf32> to vector<8x1xbf16>
    %cst_54 = arith.constant dense<0.000000e+00> : vector<8x1xf32>
    %98 = tpu.matmul %2, %97, %cst_54 {dimension_numbers = #tpu.dot_dimension_numbers<[1], [0], [0], [1], [0, 0, 1, 1], [], []>} : vector<8x8xbf16>, vector<8x1xbf16>, vector<8x1xf32> -> vector<8x1xf32>
    %99 = arith.addf %98, %7 : vector<8x1xf32>
    %cst_55 = arith.constant 0.000000e+00 : f32
    %100 = vector.broadcast %cst_55 : f32 to vector<8x1xf32>
    %101 = arith.cmpf ogt, %99, %100 : vector<8x1xf32>
    %cst_56 = arith.constant 2.000000e-01 : f32
    %102 = vector.broadcast %cst_56 : f32 to vector<8x1xf32>
    %103 = arith.mulf %102, %99 : vector<8x1xf32>
    %104 = arith.select %101, %99, %103 : vector<8x1xi1>, vector<8x1xf32>
    %105 = arith.truncf %104 : vector<8x1xf32> to vector<8x1xbf16>
    %cst_57 = arith.constant dense<0.000000e+00> : vector<16x1xf32>
    %106 = tpu.matmul %4, %105, %cst_57 {dimension_numbers = #tpu.dot_dimension_numbers<[1], [0], [0], [1], [0, 0, 1, 1], [], []>} : vector<16x8xbf16>, vector<8x1xbf16>, vector<16x1xf32> -> vector<16x1xf32>
    %107 = arith.addf %106, %9 : vector<16x1xf32>
    %cst_58 = arith.constant dense<0.000000e+00> : vector<16x16xf32>
    %108 = tpu.matmul %5, %92, %cst_58 {dimension_numbers = #tpu.dot_dimension_numbers<[1], [0], [0], [1], [0, 0, 1, 1], [], []>} : vector<16x8xbf16>, vector<8x16xbf16>, vector<16x16xf32> -> vector<16x16xf32>
    %109 = vector.broadcast %107 : vector<16x1xf32> to vector<16x16xf32>
    %110 = arith.addf %108, %109 : vector<16x16xf32>
    %cst_59 = arith.constant 0.000000e+00 : f32
    %111 = vector.broadcast %cst_59 : f32 to vector<16x16xf32>
    %112 = arith.subf %111, %110 : vector<16x16xf32>
    %113 = math.exp %112 : vector<16x16xf32>
    %cst_60 = arith.constant 1.000000e+00 : f32
    %114 = vector.broadcast %cst_60 : f32 to vector<16x16xf32>
    %115 = arith.addf %114, %113 : vector<16x16xf32>
    %116 = tpu.reciprocal %115 {approx = true} : vector<16x16xf32> -> vector<16x16xf32>
    %117 = arith.truncf %116 : vector<16x16xf32> to vector<16x16xbf16>
    %cst_61 = arith.constant dense<0.000000e+00> : vector<8x16xf32>
    %118 = tpu.matmul %92, %117, %cst_61 {dimension_numbers = #tpu.dot_dimension_numbers<[1], [0], [0], [1], [0, 0, 1, 1], [], []>} : vector<8x16xbf16>, vector<16x16xbf16>, vector<8x16xf32> -> vector<8x16xf32>
    %cst_62 = arith.constant 0.000000e+00 : f32
    %119 = vector.broadcast %cst_62 : f32 to vector<8x16xf32>
    %120 = arith.cmpf ogt, %118, %119 : vector<8x16xf32>
    %cst_63 = arith.constant 2.000000e-01 : f32
    %121 = vector.broadcast %cst_63 : f32 to vector<8x16xf32>
    %122 = arith.mulf %121, %118 : vector<8x16xf32>
    %123 = arith.select %120, %118, %122 : vector<8x16xi1>, vector<8x16xf32>
    %124 = arith.truncf %123 : vector<8x16xf32> to vector<8x16xbf16>
    %cst_64 = arith.constant dense<0.000000e+00> : vector<8x16xf32>
    %125 = tpu.matmul %3, %124, %cst_64 {dimension_numbers = #tpu.dot_dimension_numbers<[1], [0], [0], [1], [0, 0, 1, 1], [], []>} : vector<8x8xbf16>, vector<8x16xbf16>, vector<8x16xf32> -> vector<8x16xf32>
    %126 = vector.broadcast %8 : vector<8x1xf32> to vector<8x16xf32>
    %127 = arith.addf %125, %126 : vector<8x16xf32>
    %cst_65 = arith.constant 0.000000e+00 : f32
    %128 = vector.broadcast %cst_65 : f32 to vector<8x16xf32>
    %129 = arith.cmpf ogt, %127, %128 : vector<8x16xf32>
    %cst_66 = arith.constant 2.000000e-01 : f32
    %130 = vector.broadcast %cst_66 : f32 to vector<8x16xf32>
    %131 = arith.mulf %130, %127 : vector<8x16xf32>
    %132 = arith.select %129, %127, %131 : vector<8x16xi1>, vector<8x16xf32>
    %c1_67 = arith.constant 1 : index
    %c0_68 = arith.constant 0 : index
    %c0_69 = arith.constant 0 : index
    %133 = vector.load %arg10[%c1_67, %c0_68, %c0_69] : memref<5x8x16xf32, #tpu.memory_space<vmem>>, vector<1x8x16xf32>
    %134 = vector.shape_cast %133 : vector<1x8x16xf32> to vector<8x16xf32>
    %135 = vector.shape_cast %132 : vector<8x16xf32> to vector<1x8x16xf32>
    tpu.vector_store %arg10[%c1_67, %c0_68, %c0_69], %135 {strides = array<i32>} : memref<5x8x16xf32, #tpu.memory_space<vmem>>, vector<1x8x16xf32>,
    %c2_70 = arith.constant 2 : index
    %c0_71 = arith.constant 0 : index
    %c0_72 = arith.constant 0 : index
    %136 = vector.load %arg1[%c2_70, %c0_71, %c0_72] : memref<5x8x16xbf16, #tpu.memory_space<vmem>>, vector<1x8x16xbf16>
    %137 = vector.shape_cast %136 : vector<1x8x16xbf16> to vector<8x16xbf16>
    %138 = arith.extf %137 : vector<8x16xbf16> to vector<8x16xf32>
    %cst_73 = arith.constant dense<0.000000e+00> : vector<8x16xf32>
    %139 = tpu.matmul %137, %0, %cst_73 {dimension_numbers = #tpu.dot_dimension_numbers<[1], [0], [0], [1], [0, 0, 1, 1], [], []>} : vector<8x16xbf16>, vector<16x16xbf16>, vector<8x16xf32> -> vector<8x16xf32>
    %cst_74 = arith.constant 0.000000e+00 : f32
    %140 = vector.broadcast %cst_74 : f32 to vector<8x16xf32>
    %141 = arith.cmpf ogt, %139, %140 : vector<8x16xf32>
    %cst_75 = arith.constant 2.000000e-01 : f32
    %142 = vector.broadcast %cst_75 : f32 to vector<8x16xf32>
    %143 = arith.mulf %142, %139 : vector<8x16xf32>
    %144 = arith.select %141, %139, %143 : vector<8x16xi1>, vector<8x16xf32>
    %145 = arith.truncf %144 : vector<8x16xf32> to vector<8x16xbf16>
    %cst_76 = arith.constant dense<0.000000e+00> : vector<8x16xf32>
    %146 = tpu.matmul %1, %145, %cst_76 {dimension_numbers = #tpu.dot_dimension_numbers<[1], [0], [0], [1], [0, 0, 1, 1], [], []>} : vector<8x8xbf16>, vector<8x16xbf16>, vector<8x16xf32> -> vector<8x16xf32>
    %147 = vector.broadcast %6 : vector<8x1xf32> to vector<8x16xf32>
    %148 = arith.addf %146, %147 : vector<8x16xf32>
    %cst_77 = arith.constant 0.000000e+00 : f32
    %149 = vector.broadcast %cst_77 : f32 to vector<8x16xf32>
    %150 = arith.cmpf ogt, %148, %149 : vector<8x16xf32>
    %cst_78 = arith.constant 2.000000e-01 : f32
    %151 = vector.broadcast %cst_78 : f32 to vector<8x16xf32>
    %152 = arith.mulf %151, %148 : vector<8x16xf32>
    %153 = arith.select %150, %148, %152 : vector<8x16xi1>, vector<8x16xf32>
    %154 = arith.addf %138, %153 : vector<8x16xf32>
    %155 = arith.truncf %154 : vector<8x16xf32> to vector<8x16xbf16>
    %cst_79 = arith.constant dense<0.000000e+00> : vector<8xf32>
    %156 = vector.multi_reduction <add>, %154, %cst_79 [1] : vector<8x16xf32> to vector<8xf32>
    %157 = vector.shape_cast %156 : vector<8xf32> to vector<8x1xf32>
    %cst_80 = arith.constant 1.600000e+01 : f32
    %158 = vector.broadcast %cst_80 : f32 to vector<8x1xf32>
    %159 = arith.divf %157, %158 : vector<8x1xf32>
    %160 = arith.truncf %159 : vector<8x1xf32> to vector<8x1xbf16>
    %cst_81 = arith.constant dense<0.000000e+00> : vector<8x1xf32>
    %161 = tpu.matmul %2, %160, %cst_81 {dimension_numbers = #tpu.dot_dimension_numbers<[1], [0], [0], [1], [0, 0, 1, 1], [], []>} : vector<8x8xbf16>, vector<8x1xbf16>, vector<8x1xf32> -> vector<8x1xf32>
    %162 = arith.addf %161, %7 : vector<8x1xf32>
    %cst_82 = arith.constant 0.000000e+00 : f32
    %163 = vector.broadcast %cst_82 : f32 to vector<8x1xf32>
    %164 = arith.cmpf ogt, %162, %163 : vector<8x1xf32>
    %cst_83 = arith.constant 2.000000e-01 : f32
    %165 = vector.broadcast %cst_83 : f32 to vector<8x1xf32>
    %166 = arith.mulf %165, %162 : vector<8x1xf32>
    %167 = arith.select %164, %162, %166 : vector<8x1xi1>, vector<8x1xf32>
    %168 = arith.truncf %167 : vector<8x1xf32> to vector<8x1xbf16>
    %cst_84 = arith.constant dense<0.000000e+00> : vector<16x1xf32>
    %169 = tpu.matmul %4, %168, %cst_84 {dimension_numbers = #tpu.dot_dimension_numbers<[1], [0], [0], [1], [0, 0, 1, 1], [], []>} : vector<16x8xbf16>, vector<8x1xbf16>, vector<16x1xf32> -> vector<16x1xf32>
    %170 = arith.addf %169, %9 : vector<16x1xf32>
    %cst_85 = arith.constant dense<0.000000e+00> : vector<16x16xf32>
    %171 = tpu.matmul %5, %155, %cst_85 {dimension_numbers = #tpu.dot_dimension_numbers<[1], [0], [0], [1], [0, 0, 1, 1], [], []>} : vector<16x8xbf16>, vector<8x16xbf16>, vector<16x16xf32> -> vector<16x16xf32>
    %172 = vector.broadcast %170 : vector<16x1xf32> to vector<16x16xf32>
    %173 = arith.addf %171, %172 : vector<16x16xf32>
    %cst_86 = arith.constant 0.000000e+00 : f32
    %174 = vector.broadcast %cst_86 : f32 to vector<16x16xf32>
    %175 = arith.subf %174, %173 : vector<16x16xf32>
    %176 = math.exp %175 : vector<16x16xf32>
    %cst_87 = arith.constant 1.000000e+00 : f32
    %177 = vector.broadcast %cst_87 : f32 to vector<16x16xf32>
    %178 = arith.addf %177, %176 : vector<16x16xf32>
    %179 = tpu.reciprocal %178 {approx = true} : vector<16x16xf32> -> vector<16x16xf32>
    %180 = arith.truncf %179 : vector<16x16xf32> to vector<16x16xbf16>
    %cst_88 = arith.constant dense<0.000000e+00> : vector<8x16xf32>
    %181 = tpu.matmul %155, %180, %cst_88 {dimension_numbers = #tpu.dot_dimension_numbers<[1], [0], [0], [1], [0, 0, 1, 1], [], []>} : vector<8x16xbf16>, vector<16x16xbf16>, vector<8x16xf32> -> vector<8x16xf32>
    %cst_89 = arith.constant 0.000000e+00 : f32
    %182 = vector.broadcast %cst_89 : f32 to vector<8x16xf32>
    %183 = arith.cmpf ogt, %181, %182 : vector<8x16xf32>
    %cst_90 = arith.constant 2.000000e-01 : f32
    %184 = vector.broadcast %cst_90 : f32 to vector<8x16xf32>
    %185 = arith.mulf %184, %181 : vector<8x16xf32>
    %186 = arith.select %183, %181, %185 : vector<8x16xi1>, vector<8x16xf32>
    %187 = arith.truncf %186 : vector<8x16xf32> to vector<8x16xbf16>
    %cst_91 = arith.constant dense<0.000000e+00> : vector<8x16xf32>
    %188 = tpu.matmul %3, %187, %cst_91 {dimension_numbers = #tpu.dot_dimension_numbers<[1], [0], [0], [1], [0, 0, 1, 1], [], []>} : vector<8x8xbf16>, vector<8x16xbf16>, vector<8x16xf32> -> vector<8x16xf32>
    %189 = vector.broadcast %8 : vector<8x1xf32> to vector<8x16xf32>
    %190 = arith.addf %188, %189 : vector<8x16xf32>
    %cst_92 = arith.constant 0.000000e+00 : f32
    %191 = vector.broadcast %cst_92 : f32 to vector<8x16xf32>
    %192 = arith.cmpf ogt, %190, %191 : vector<8x16xf32>
    %cst_93 = arith.constant 2.000000e-01 : f32
    %193 = vector.broadcast %cst_93 : f32 to vector<8x16xf32>
    %194 = arith.mulf %193, %190 : vector<8x16xf32>
    %195 = arith.select %192, %190, %194 : vector<8x16xi1>, vector<8x16xf32>
    %c2_94 = arith.constant 2 : index
    %c0_95 = arith.constant 0 : index
    %c0_96 = arith.constant 0 : index
    %196 = vector.load %arg10[%c2_94, %c0_95, %c0_96] : memref<5x8x16xf32, #tpu.memory_space<vmem>>, vector<1x8x16xf32>
    %197 = vector.shape_cast %196 : vector<1x8x16xf32> to vector<8x16xf32>
    %198 = vector.shape_cast %195 : vector<8x16xf32> to vector<1x8x16xf32>
    tpu.vector_store %arg10[%c2_94, %c0_95, %c0_96], %198 {strides = array<i32>} : memref<5x8x16xf32, #tpu.memory_space<vmem>>, vector<1x8x16xf32>,
    %c3 = arith.constant 3 : index
    %c0_97 = arith.constant 0 : index
    %c0_98 = arith.constant 0 : index
    %199 = vector.load %arg1[%c3, %c0_97, %c0_98] : memref<5x8x16xbf16, #tpu.memory_space<vmem>>, vector<1x8x16xbf16>
    %200 = vector.shape_cast %199 : vector<1x8x16xbf16> to vector<8x16xbf16>
    %201 = arith.extf %200 : vector<8x16xbf16> to vector<8x16xf32>
    %cst_99 = arith.constant dense<0.000000e+00> : vector<8x16xf32>
    %202 = tpu.matmul %200, %0, %cst_99 {dimension_numbers = #tpu.dot_dimension_numbers<[1], [0], [0], [1], [0, 0, 1, 1], [], []>} : vector<8x16xbf16>, vector<16x16xbf16>, vector<8x16xf32> -> vector<8x16xf32>
    %cst_100 = arith.constant 0.000000e+00 : f32
    %203 = vector.broadcast %cst_100 : f32 to vector<8x16xf32>
    %204 = arith.cmpf ogt, %202, %203 : vector<8x16xf32>
    %cst_101 = arith.constant 2.000000e-01 : f32
    %205 = vector.broadcast %cst_101 : f32 to vector<8x16xf32>
    %206 = arith.mulf %205, %202 : vector<8x16xf32>
    %207 = arith.select %204, %202, %206 : vector<8x16xi1>, vector<8x16xf32>
    %208 = arith.truncf %207 : vector<8x16xf32> to vector<8x16xbf16>
    %cst_102 = arith.constant dense<0.000000e+00> : vector<8x16xf32>
    %209 = tpu.matmul %1, %208, %cst_102 {dimension_numbers = #tpu.dot_dimension_numbers<[1], [0], [0], [1], [0, 0, 1, 1], [], []>} : vector<8x8xbf16>, vector<8x16xbf16>, vector<8x16xf32> -> vector<8x16xf32>
    %210 = vector.broadcast %6 : vector<8x1xf32> to vector<8x16xf32>
    %211 = arith.addf %209, %210 : vector<8x16xf32>
    %cst_103 = arith.constant 0.000000e+00 : f32
    %212 = vector.broadcast %cst_103 : f32 to vector<8x16xf32>
    %213 = arith.cmpf ogt, %211, %212 : vector<8x16xf32>
    %cst_104 = arith.constant 2.000000e-01 : f32
    %214 = vector.broadcast %cst_104 : f32 to vector<8x16xf32>
    %215 = arith.mulf %214, %211 : vector<8x16xf32>
    %216 = arith.select %213, %211, %215 : vector<8x16xi1>, vector<8x16xf32>
    %217 = arith.addf %201, %216 : vector<8x16xf32>
    %218 = arith.truncf %217 : vector<8x16xf32> to vector<8x16xbf16>
    %cst_105 = arith.constant dense<0.000000e+00> : vector<8xf32>
    %219 = vector.multi_reduction <add>, %217, %cst_105 [1] : vector<8x16xf32> to vector<8xf32>
    %220 = vector.shape_cast %219 : vector<8xf32> to vector<8x1xf32>
    %cst_106 = arith.constant 1.600000e+01 : f32
    %221 = vector.broadcast %cst_106 : f32 to vector<8x1xf32>
    %222 = arith.divf %220, %221 : vector<8x1xf32>
    %223 = arith.truncf %222 : vector<8x1xf32> to vector<8x1xbf16>
    %cst_107 = arith.constant dense<0.000000e+00> : vector<8x1xf32>
    %224 = tpu.matmul %2, %223, %cst_107 {dimension_numbers = #tpu.dot_dimension_numbers<[1], [0], [0], [1], [0, 0, 1, 1], [], []>} : vector<8x8xbf16>, vector<8x1xbf16>, vector<8x1xf32> -> vector<8x1xf32>
    %225 = arith.addf %224, %7 : vector<8x1xf32>
    %cst_108 = arith.constant 0.000000e+00 : f32
    %226 = vector.broadcast %cst_108 : f32 to vector<8x1xf32>
    %227 = arith.cmpf ogt, %225, %226 : vector<8x1xf32>
    %cst_109 = arith.constant 2.000000e-01 : f32
    %228 = vector.broadcast %cst_109 : f32 to vector<8x1xf32>
    %229 = arith.mulf %228, %225 : vector<8x1xf32>
    %230 = arith.select %227, %225, %229 : vector<8x1xi1>, vector<8x1xf32>
    %231 = arith.truncf %230 : vector<8x1xf32> to vector<8x1xbf16>
    %cst_110 = arith.constant dense<0.000000e+00> : vector<16x1xf32>
    %232 = tpu.matmul %4, %231, %cst_110 {dimension_numbers = #tpu.dot_dimension_numbers<[1], [0], [0], [1], [0, 0, 1, 1], [], []>} : vector<16x8xbf16>, vector<8x1xbf16>, vector<16x1xf32> -> vector<16x1xf32>
    %233 = arith.addf %232, %9 : vector<16x1xf32>
    %cst_111 = arith.constant dense<0.000000e+00> : vector<16x16xf32>
    %234 = tpu.matmul %5, %218, %cst_111 {dimension_numbers = #tpu.dot_dimension_numbers<[1], [0], [0], [1], [0, 0, 1, 1], [], []>} : vector<16x8xbf16>, vector<8x16xbf16>, vector<16x16xf32> -> vector<16x16xf32>
    %235 = vector.broadcast %233 : vector<16x1xf32> to vector<16x16xf32>
    %236 = arith.addf %234, %235 : vector<16x16xf32>
    %cst_112 = arith.constant 0.000000e+00 : f32
    %237 = vector.broadcast %cst_112 : f32 to vector<16x16xf32>
    %238 = arith.subf %237, %236 : vector<16x16xf32>
    %239 = math.exp %238 : vector<16x16xf32>
    %cst_113 = arith.constant 1.000000e+00 : f32
    %240 = vector.broadcast %cst_113 : f32 to vector<16x16xf32>
    %241 = arith.addf %240, %239 : vector<16x16xf32>
    %242 = tpu.reciprocal %241 {approx = true} : vector<16x16xf32> -> vector<16x16xf32>
    %243 = arith.truncf %242 : vector<16x16xf32> to vector<16x16xbf16>
    %cst_114 = arith.constant dense<0.000000e+00> : vector<8x16xf32>
    %244 = tpu.matmul %218, %243, %cst_114 {dimension_numbers = #tpu.dot_dimension_numbers<[1], [0], [0], [1], [0, 0, 1, 1], [], []>} : vector<8x16xbf16>, vector<16x16xbf16>, vector<8x16xf32> -> vector<8x16xf32>
    %cst_115 = arith.constant 0.000000e+00 : f32
    %245 = vector.broadcast %cst_115 : f32 to vector<8x16xf32>
    %246 = arith.cmpf ogt, %244, %245 : vector<8x16xf32>
    %cst_116 = arith.constant 2.000000e-01 : f32
    %247 = vector.broadcast %cst_116 : f32 to vector<8x16xf32>
    %248 = arith.mulf %247, %244 : vector<8x16xf32>
    %249 = arith.select %246, %244, %248 : vector<8x16xi1>, vector<8x16xf32>
    %250 = arith.truncf %249 : vector<8x16xf32> to vector<8x16xbf16>
    %cst_117 = arith.constant dense<0.000000e+00> : vector<8x16xf32>
    %251 = tpu.matmul %3, %250, %cst_117 {dimension_numbers = #tpu.dot_dimension_numbers<[1], [0], [0], [1], [0, 0, 1, 1], [], []>} : vector<8x8xbf16>, vector<8x16xbf16>, vector<8x16xf32> -> vector<8x16xf32>
    %252 = vector.broadcast %8 : vector<8x1xf32> to vector<8x16xf32>
    %253 = arith.addf %251, %252 : vector<8x16xf32>
    %cst_118 = arith.constant 0.000000e+00 : f32
    %254 = vector.broadcast %cst_118 : f32 to vector<8x16xf32>
    %255 = arith.cmpf ogt, %253, %254 : vector<8x16xf32>
    %cst_119 = arith.constant 2.000000e-01 : f32
    %256 = vector.broadcast %cst_119 : f32 to vector<8x16xf32>
    %257 = arith.mulf %256, %253 : vector<8x16xf32>
    %258 = arith.select %255, %253, %257 : vector<8x16xi1>, vector<8x16xf32>
    %c3_120 = arith.constant 3 : index
    %c0_121 = arith.constant 0 : index
    %c0_122 = arith.constant 0 : index
    %259 = vector.load %arg10[%c3_120, %c0_121, %c0_122] : memref<5x8x16xf32, #tpu.memory_space<vmem>>, vector<1x8x16xf32>
    %260 = vector.shape_cast %259 : vector<1x8x16xf32> to vector<8x16xf32>
    %261 = vector.shape_cast %258 : vector<8x16xf32> to vector<1x8x16xf32>
    tpu.vector_store %arg10[%c3_120, %c0_121, %c0_122], %261 {strides = array<i32>} : memref<5x8x16xf32, #tpu.memory_space<vmem>>, vector<1x8x16xf32>,
    %c4 = arith.constant 4 : index
    %c0_123 = arith.constant 0 : index
    %c0_124 = arith.constant 0 : index
    %262 = vector.load %arg1[%c4, %c0_123, %c0_124] : memref<5x8x16xbf16, #tpu.memory_space<vmem>>, vector<1x8x16xbf16>
    %263 = vector.shape_cast %262 : vector<1x8x16xbf16> to vector<8x16xbf16>
    %264 = arith.extf %263 : vector<8x16xbf16> to vector<8x16xf32>
    %cst_125 = arith.constant dense<0.000000e+00> : vector<8x16xf32>
    %265 = tpu.matmul %263, %0, %cst_125 {dimension_numbers = #tpu.dot_dimension_numbers<[1], [0], [0], [1], [0, 0, 1, 1], [], []>} : vector<8x16xbf16>, vector<16x16xbf16>, vector<8x16xf32> -> vector<8x16xf32>
    %cst_126 = arith.constant 0.000000e+00 : f32
    %266 = vector.broadcast %cst_126 : f32 to vector<8x16xf32>
    %267 = arith.cmpf ogt, %265, %266 : vector<8x16xf32>
    %cst_127 = arith.constant 2.000000e-01 : f32
    %268 = vector.broadcast %cst_127 : f32 to vector<8x16xf32>
    %269 = arith.mulf %268, %265 : vector<8x16xf32>
    %270 = arith.select %267, %265, %269 : vector<8x16xi1>, vector<8x16xf32>
    %271 = arith.truncf %270 : vector<8x16xf32> to vector<8x16xbf16>
    %cst_128 = arith.constant dense<0.000000e+00> : vector<8x16xf32>
    %272 = tpu.matmul %1, %271, %cst_128 {dimension_numbers = #tpu.dot_dimension_numbers<[1], [0], [0], [1], [0, 0, 1, 1], [], []>} : vector<8x8xbf16>, vector<8x16xbf16>, vector<8x16xf32> -> vector<8x16xf32>
    %273 = vector.broadcast %6 : vector<8x1xf32> to vector<8x16xf32>
    %274 = arith.addf %272, %273 : vector<8x16xf32>
    %cst_129 = arith.constant 0.000000e+00 : f32
    %275 = vector.broadcast %cst_129 : f32 to vector<8x16xf32>
    %276 = arith.cmpf ogt, %274, %275 : vector<8x16xf32>
    %cst_130 = arith.constant 2.000000e-01 : f32
    %277 = vector.broadcast %cst_130 : f32 to vector<8x16xf32>
    %278 = arith.mulf %277, %274 : vector<8x16xf32>
    %279 = arith.select %276, %274, %278 : vector<8x16xi1>, vector<8x16xf32>
    %280 = arith.addf %264, %279 : vector<8x16xf32>
    %281 = arith.truncf %280 : vector<8x16xf32> to vector<8x16xbf16>
    %cst_131 = arith.constant dense<0.000000e+00> : vector<8xf32>
    %282 = vector.multi_reduction <add>, %280, %cst_131 [1] : vector<8x16xf32> to vector<8xf32>
    %283 = vector.shape_cast %282 : vector<8xf32> to vector<8x1xf32>
    %cst_132 = arith.constant 1.600000e+01 : f32
    %284 = vector.broadcast %cst_132 : f32 to vector<8x1xf32>
    %285 = arith.divf %283, %284 : vector<8x1xf32>
    %286 = arith.truncf %285 : vector<8x1xf32> to vector<8x1xbf16>
    %cst_133 = arith.constant dense<0.000000e+00> : vector<8x1xf32>
    %287 = tpu.matmul %2, %286, %cst_133 {dimension_numbers = #tpu.dot_dimension_numbers<[1], [0], [0], [1], [0, 0, 1, 1], [], []>} : vector<8x8xbf16>, vector<8x1xbf16>, vector<8x1xf32> -> vector<8x1xf32>
    %288 = arith.addf %287, %7 : vector<8x1xf32>
    %cst_134 = arith.constant 0.000000e+00 : f32
    %289 = vector.broadcast %cst_134 : f32 to vector<8x1xf32>
    %290 = arith.cmpf ogt, %288, %289 : vector<8x1xf32>
    %cst_135 = arith.constant 2.000000e-01 : f32
    %291 = vector.broadcast %cst_135 : f32 to vector<8x1xf32>
    %292 = arith.mulf %291, %288 : vector<8x1xf32>
    %293 = arith.select %290, %288, %292 : vector<8x1xi1>, vector<8x1xf32>
    %294 = arith.truncf %293 : vector<8x1xf32> to vector<8x1xbf16>
    %cst_136 = arith.constant dense<0.000000e+00> : vector<16x1xf32>
    %295 = tpu.matmul %4, %294, %cst_136 {dimension_numbers = #tpu.dot_dimension_numbers<[1], [0], [0], [1], [0, 0, 1, 1], [], []>} : vector<16x8xbf16>, vector<8x1xbf16>, vector<16x1xf32> -> vector<16x1xf32>
    %296 = arith.addf %295, %9 : vector<16x1xf32>
    %cst_137 = arith.constant dense<0.000000e+00> : vector<16x16xf32>
    %297 = tpu.matmul %5, %281, %cst_137 {dimension_numbers = #tpu.dot_dimension_numbers<[1], [0], [0], [1], [0, 0, 1, 1], [], []>} : vector<16x8xbf16>, vector<8x16xbf16>, vector<16x16xf32> -> vector<16x16xf32>
    %298 = vector.broadcast %296 : vector<16x1xf32> to vector<16x16xf32>
    %299 = arith.addf %297, %298 : vector<16x16xf32>
    %cst_138 = arith.constant 0.000000e+00 : f32
    %300 = vector.broadcast %cst_138 : f32 to vector<16x16xf32>
    %301 = arith.subf %300, %299 : vector<16x16xf32>
    %302 = math.exp %301 : vector<16x16xf32>
    %cst_139 = arith.constant 1.000000e+00 : f32
    %303 = vector.broadcast %cst_139 : f32 to vector<16x16xf32>
    %304 = arith.addf %303, %302 : vector<16x16xf32>
    %305 = tpu.reciprocal %304 {approx = true} : vector<16x16xf32> -> vector<16x16xf32>
    %306 = arith.truncf %305 : vector<16x16xf32> to vector<16x16xbf16>
    %cst_140 = arith.constant dense<0.000000e+00> : vector<8x16xf32>
    %307 = tpu.matmul %281, %306, %cst_140 {dimension_numbers = #tpu.dot_dimension_numbers<[1], [0], [0], [1], [0, 0, 1, 1], [], []>} : vector<8x16xbf16>, vector<16x16xbf16>, vector<8x16xf32> -> vector<8x16xf32>
    %cst_141 = arith.constant 0.000000e+00 : f32
    %308 = vector.broadcast %cst_141 : f32 to vector<8x16xf32>
    %309 = arith.cmpf ogt, %307, %308 : vector<8x16xf32>
    %cst_142 = arith.constant 2.000000e-01 : f32
    %310 = vector.broadcast %cst_142 : f32 to vector<8x16xf32>
    %311 = arith.mulf %310, %307 : vector<8x16xf32>
    %312 = arith.select %309, %307, %311 : vector<8x16xi1>, vector<8x16xf32>
    %313 = arith.truncf %312 : vector<8x16xf32> to vector<8x16xbf16>
    %cst_143 = arith.constant dense<0.000000e+00> : vector<8x16xf32>
    %314 = tpu.matmul %3, %313, %cst_143 {dimension_numbers = #tpu.dot_dimension_numbers<[1], [0], [0], [1], [0, 0, 1, 1], [], []>} : vector<8x8xbf16>, vector<8x16xbf16>, vector<8x16xf32> -> vector<8x16xf32>
    %315 = vector.broadcast %8 : vector<8x1xf32> to vector<8x16xf32>
    %316 = arith.addf %314, %315 : vector<8x16xf32>
    %cst_144 = arith.constant 0.000000e+00 : f32
    %317 = vector.broadcast %cst_144 : f32 to vector<8x16xf32>
    %318 = arith.cmpf ogt, %316, %317 : vector<8x16xf32>
    %cst_145 = arith.constant 2.000000e-01 : f32
    %319 = vector.broadcast %cst_145 : f32 to vector<8x16xf32>
    %320 = arith.mulf %319, %316 : vector<8x16xf32>
    %321 = arith.select %318, %316, %320 : vector<8x16xi1>, vector<8x16xf32>
    %c4_146 = arith.constant 4 : index
    %c0_147 = arith.constant 0 : index
    %c0_148 = arith.constant 0 : index
    %322 = vector.load %arg10[%c4_146, %c0_147, %c0_148] : memref<5x8x16xf32, #tpu.memory_space<vmem>>, vector<1x8x16xf32>
    %323 = vector.shape_cast %322 : vector<1x8x16xf32> to vector<8x16xf32>
    %324 = vector.shape_cast %321 : vector<8x16xf32> to vector<1x8x16xf32>
    tpu.vector_store %arg10[%c4_146, %c0_147, %c0_148], %324 {strides = array<i32>} : memref<5x8x16xf32, #tpu.memory_space<vmem>>, vector<1x8x16xf32>,
    return
  }
  func.func @transform_0(%arg0: i32) -> (i32, i32, i32) {
    %c0_i32 = arith.constant 0 : i32
    %c0_i32_0 = arith.constant 0 : i32
    %c0_i32_1 = arith.constant 0 : i32
    return %arg0, %c0_i32, %c0_i32_0 : i32, i32, i32
  }
  func.func @transform_1(%arg0: i32) -> (i32, i32) {
    %c0_i32 = arith.constant 0 : i32
    %c0_i32_0 = arith.constant 0 : i32
    %c0_i32_1 = arith.constant 0 : i32
    return %c0_i32, %c0_i32_0 : i32, i32
  }
  func.func @transform_2(%arg0: i32) -> (i32, i32) {
    %c0_i32 = arith.constant 0 : i32
    %c0_i32_0 = arith.constant 0 : i32
    %c0_i32_1 = arith.constant 0 : i32
    return %c0_i32, %c0_i32_0 : i32, i32
  }
  func.func @transform_3(%arg0: i32) -> (i32, i32) {
    %c0_i32 = arith.constant 0 : i32
    %c0_i32_0 = arith.constant 0 : i32
    %c0_i32_1 = arith.constant 0 : i32
    return %c0_i32, %c0_i32_0 : i32, i32
  }
  func.func @transform_4(%arg0: i32) -> (i32, i32) {
    %c0_i32 = arith.constant 0 : i32
    %c0_i32_0 = arith.constant 0 : i32
    %c0_i32_1 = arith.constant 0 : i32
    return %c0_i32, %c0_i32_0 : i32, i32
  }
  func.func @transform_5(%arg0: i32) -> (i32, i32) {
    %c0_i32 = arith.constant 0 : i32
    %c0_i32_0 = arith.constant 0 : i32
    %c0_i32_1 = arith.constant 0 : i32
    return %c0_i32, %c0_i32_0 : i32, i32
  }
  func.func @transform_6(%arg0: i32) -> (i32, i32) {
    %c0_i32 = arith.constant 0 : i32
    %c0_i32_0 = arith.constant 0 : i32
    %c0_i32_1 = arith.constant 0 : i32
    return %c0_i32, %c0_i32_0 : i32, i32
  }
  func.func @transform_7(%arg0: i32) -> (i32, i32) {
    %c0_i32 = arith.constant 0 : i32
    %c0_i32_0 = arith.constant 0 : i32
    %c0_i32_1 = arith.constant 0 : i32
    return %c0_i32, %c0_i32_0 : i32, i32
  }
  func.func @transform_8(%arg0: i32) -> (i32, i32) {
    %c0_i32 = arith.constant 0 : i32
    %c0_i32_0 = arith.constant 0 : i32
    %c0_i32_1 = arith.constant 0 : i32
    return %c0_i32, %c0_i32_0 : i32, i32
  }
  func.func @transform_9(%arg0: i32) -> (i32, i32, i32) {
    %c0_i32 = arith.constant 0 : i32
    %c0_i32_0 = arith.constant 0 : i32
    %c0_i32_1 = arith.constant 0 : i32
    return %arg0, %c0_i32, %c0_i32_0 : i32, i32, i32
  }
}

</mosaic_0001>

<llo_original>
// kernel: tpu_custom_call.1
$region0: #{tpu_custom_call.1}
  #allocation0 [shape = 'u32[]', space=smem, size = 0x4, offset = 0x4, fixed_abs, tag = 'smem constant byte address 0x4 - core index']
  #allocation1 [shape = 'u32[144,128]{1,0:T(1,128)}', space=vmem, size = 0x12000, scoped, tag = 'internal scratch']
  %s0 = inlined_call_operand.vmem [shape: bf16[10,8,16], index: 0, kind: input, shape index: {}]
  %s1 = inlined_call_operand.vmem [shape: bf16[16,16], index: 1, kind: input, shape index: {}]
  %s2 = inlined_call_operand.hbm [shape: bf16[8,8], index: 2, kind: input, shape index: {}]
  %s3 = inlined_call_operand.vmem [shape: bf16[8,8], index: 3, kind: input, shape index: {}]
  %s4 = inlined_call_operand.vmem [shape: bf16[8,8], index: 4, kind: input, shape index: {}]
  %s5 = inlined_call_operand.vmem [shape: bf16[16,8], index: 5, kind: input, shape index: {}]
  %s6 = inlined_call_operand.vmem [shape: bf16[16,8], index: 6, kind: input, shape index: {}]
  %s7 = inlined_call_operand.vmem [shape: f32[8,3], index: 7, kind: input, shape index: {}]
  %s8 = inlined_call_operand.vmem [shape: f32[16,1], index: 8, kind: input, shape index: {}]
  %s9 = inlined_call_operand.hbm [shape: f32[10,8,16], index: 9, kind: output, shape index: {}]
  %s10 = sld [smem:[#allocation0]]
  $region73: #{tpu_custom_call.1} parent=0
    _
  %s12 = ssub.s32 1, %s10
  %s13 = scalar_select 0, %s12, %s10
  $region1: #{tpu_custom_call.1} parent=0
    #allocation2 [shape = 'u8[2048]{0}', space=vmem, size = 0x800, scoped, tag = 'input window, operand 2, single buffered']
    #allocation3 [shape = 's32[2]{0}', space=sflag, size = 0x8, scoped, tag = 'scoped memory for tpu_custom_call.1']
    #allocation4 [shape = 's32[2]{0}', space=sflag, size = 0x8, scoped, tag = 'scoped memory for tpu_custom_call.1']
    #allocation5 [shape = 'u8[40960]{0}', space=vmem, size = 0xa000, scoped, tag = 'output window, operand 0']
    %14 = vsyncpa [#allocation3], 0
    %15 = vsyncpa [#allocation4], 0
    %s16 = scalar_lea.sflag [#allocation4], 1
    %17 = vsyncpa %s16, 0
    loop: start=0, step=1, limit=4
    $region2: #{tpu_custom_call.1} parent=1 // loop_pre_header
      _
    $region3: #{tpu_custom_call.1} parent=1 // loop_header
      %s19 = sphi 0, %s23
      %p20 = scmp.ge.s32.totalorder %s19, 4
      %s29 = sphi 0, %s31
      %s32 = sphi 0, %s29
      %s33 = sphi 0, %s32
      %s49 = sphi 0, %s33
      %s53 = sphi 0, %s53
      %s55 = sphi 0, %s53
      %s56 = sphi 0, %s55
      %s70 = sphi 0, %s56
      %s74 = sphi 0, %s74
      %s76 = sphi 0, %s74
      %s77 = sphi 0, %s76
      %s91 = sphi 0, %s77
      %s95 = sphi 0, %s95
      %s97 = sphi 0, %s95
      %s98 = sphi 0, %s97
      %s112 = sphi 0, %s98
      %s116 = sphi 0, %s116
      %s118 = sphi 0, %s116
      %s119 = sphi 0, %s118
      %s133 = sphi 0, %s119
      %s137 = sphi 0, %s137
      %s139 = sphi 0, %s137
      %s140 = sphi 0, %s139
      %s154 = sphi 0, %s140
      %s158 = sphi 0, %s158
      %s160 = sphi 0, %s158
      %s161 = sphi 0, %s160
      %s175 = sphi 0, %s161
      %s179 = sphi 0, %s179
      %s181 = sphi 0, %s179
      %s182 = sphi 0, %s181
      %s196 = sphi 0, %s182
      %s200 = sphi 0, %s200
      %s202 = sphi 0, %s200
      %s203 = sphi 0, %s202
      %s217 = sphi 0, %s203
      %s223 = sphi 0, %s225
      %s226 = sphi 0, %s223
      %s227 = sphi 0, %s226
      %s243 = sphi 0, %s227
    $region4: #{tpu_custom_call.1} parent=1 // loop_header_branch
      %22 = sbr.rel (%p20) target = $region8
    $region5: #{tpu_custom_call.1} parent=1 // loop_body
      %s24 = ssub.s32 %s19, 1
      %s25 = ssub.s32 %s19, 2
      %s26 = sadd.s32 %s19, 1
      %s27 = ssub.s32 %s19, %s26
      %p28 = scmp.eq.s32.totalorder %s27, 0
      %s30 = sadd.s32 %s29, 1
      %s31 = scalar_select %p28, %s29, %s30
      %p34 = pneg %p28
      %p35 = scmp.eq.s32.totalorder %s19, 1
      %p36 = por %p34, %p35
      %p37 = scmp.ne.s32.totalorder %s29, %s32
      %p38 = scmp.eq.s32.totalorder %s19, 0
      %p39 = por %p37, %p38
      %p40 = scmp.ne.s32.totalorder %s29, %s32
      %p41 = scmp.eq.s32.totalorder %s24, 1
      %p42 = por %p40, %p41
      %p43 = scmp.ne.s32.totalorder %s32, %s33
      %p44 = scmp.eq.s32.totalorder %s24, 0
      %p45 = por %p43, %p44
      %p46 = scmp.ne.s32.totalorder %s32, %s33
      %p47 = scmp.eq.s32.totalorder %s25, 1
      %p48 = por %p46, %p47
      %p50 = scmp.ne.s32.totalorder %s33, %s49
      %p51 = scmp.eq.s32.totalorder %s25, 0
      %p52 = por %p50, %p51
      %s54 = sadd.s32 %s53, 1
      %p57 = scmp.eq.s32.totalorder %s19, 1
      %p58 = scmp.ne.s32.totalorder %s53, %s55
      %p59 = scmp.eq.s32.totalorder %s19, 0
      %p60 = por %p58, %p59
      %p61 = scmp.ne.s32.totalorder %s53, %s55
      %p62 = scmp.eq.s32.totalorder %s24, 1
      %p63 = por %p61, %p62
      %p64 = scmp.ne.s32.totalorder %s55, %s56
      %p65 = scmp.eq.s32.totalorder %s24, 0
      %p66 = por %p64, %p65
      %p67 = scmp.ne.s32.totalorder %s55, %s56
      %p68 = scmp.eq.s32.totalorder %s25, 1
      %p69 = por %p67, %p68
      %p71 = scmp.ne.s32.totalorder %s56, %s70
      %p72 = scmp.eq.s32.totalorder %s25, 0
      %p73 = por %p71, %p72
      %s75 = sadd.s32 %s74, 1
      %p78 = scmp.eq.s32.totalorder %s19, 1
      %p79 = scmp.ne.s32.totalorder %s74, %s76
      %p80 = scmp.eq.s32.totalorder %s19, 0
      %p81 = por %p79, %p80
      %p82 = scmp.ne.s32.totalorder %s74, %s76
      %p83 = scmp.eq.s32.totalorder %s24, 1
      %p84 = por %p82, %p83
      %p85 = scmp.ne.s32.totalorder %s76, %s77
      %p86 = scmp.eq.s32.totalorder %s24, 0
      %p87 = por %p85, %p86
      %p88 = scmp.ne.s32.totalorder %s76, %s77
      %p89 = scmp.eq.s32.totalorder %s25, 1
      %p90 = por %p88, %p89
      %p92 = scmp.ne.s32.totalorder %s77, %s91
      %p93 = scmp.eq.s32.totalorder %s25, 0
      %p94 = por %p92, %p93
      %s96 = sadd.s32 %s95, 1
      %p99 = scmp.eq.s32.totalorder %s19, 1
      %p100 = scmp.ne.s32.totalorder %s95, %s97
      %p101 = scmp.eq.s32.totalorder %s19, 0
      %p102 = por %p100, %p101
      %p103 = scmp.ne.s32.totalorder %s95, %s97
      %p104 = scmp.eq.s32.totalorder %s24, 1
      %p105 = por %p103, %p104
      %p106 = scmp.ne.s32.totalorder %s97, %s98
      %p107 = scmp.eq.s32.totalorder %s24, 0
      %p108 = por %p106, %p107
      %p109 = scmp.ne.s32.totalorder %s97, %s98
      %p110 = scmp.eq.s32.totalorder %s25, 1
      %p111 = por %p109, %p110
      %p113 = scmp.ne.s32.totalorder %s98, %s112
      %p114 = scmp.eq.s32.totalorder %s25, 0
      %p115 = por %p113, %p114
      %s117 = sadd.s32 %s116, 1
      %p120 = scmp.eq.s32.totalorder %s19, 1
      %p121 = scmp.ne.s32.totalorder %s116, %s118
      %p122 = scmp.eq.s32.totalorder %s19, 0
      %p123 = por %p121, %p122
      %p124 = scmp.ne.s32.totalorder %s116, %s118
      %p125 = scmp.eq.s32.totalorder %s24, 1
      %p126 = por %p124, %p125
      %p127 = scmp.ne.s32.totalorder %s118, %s119
      %p128 = scmp.eq.s32.totalorder %s24, 0
      %p129 = por %p127, %p128
      %p130 = scmp.ne.s32.totalorder %s118, %s119
      %p131 = scmp.eq.s32.totalorder %s25, 1
      %p132 = por %p130, %p131
      %p134 = scmp.ne.s32.totalorder %s119, %s133
      %p135 = scmp.eq.s32.totalorder %s25, 0
      %p136 = por %p134, %p135
      %s138 = sadd.s32 %s137, 1
      %p141 = scmp.eq.s32.totalorder %s19, 1
      %p142 = scmp.ne.s32.totalorder %s137, %s139
      %p143 = scmp.eq.s32.totalorder %s19, 0
      %p144 = por %p142, %p143
      %p145 = scmp.ne.s32.totalorder %s137, %s139
      %p146 = scmp.eq.s32.totalorder %s24, 1
      %p147 = por %p145, %p146
      %p148 = scmp.ne.s32.totalorder %s139, %s140
      %p149 = scmp.eq.s32.totalorder %s24, 0
      %p150 = por %p148, %p149
      %p151 = scmp.ne.s32.totalorder %s139, %s140
      %p152 = scmp.eq.s32.totalorder %s25, 1
      %p153 = por %p151, %p152
      %p155 = scmp.ne.s32.totalorder %s140, %s154
      %p156 = scmp.eq.s32.totalorder %s25, 0
      %p157 = por %p155, %p156
      %s159 = sadd.s32 %s158, 1
      %p162 = scmp.eq.s32.totalorder %s19, 1
      %p163 = scmp.ne.s32.totalorder %s158, %s160
      %p164 = scmp.eq.s32.totalorder %s19, 0
      %p165 = por %p163, %p164
      %p166 = scmp.ne.s32.totalorder %s158, %s160
      %p167 = scmp.eq.s32.totalorder %s24, 1
      %p168 = por %p166, %p167
      %p169 = scmp.ne.s32.totalorder %s160, %s161
      %p170 = scmp.eq.s32.totalorder %s24, 0
      %p171 = por %p169, %p170
      %p172 = scmp.ne.s32.totalorder %s160, %s161
      %p173 = scmp.eq.s32.totalorder %s25, 1
      %p174 = por %p172, %p173
      %p176 = scmp.ne.s32.totalorder %s161, %s175
      %p177 = scmp.eq.s32.totalorder %s25, 0
      %p178 = por %p176, %p177
      %s180 = sadd.s32 %s179, 1
      %p183 = scmp.eq.s32.totalorder %s19, 1
      %p184 = scmp.ne.s32.totalorder %s179, %s181
      %p185 = scmp.eq.s32.totalorder %s19, 0
      %p186 = por %p184, %p185
      %p187 = scmp.ne.s32.totalorder %s179, %s181
      %p188 = scmp.eq.s32.totalorder %s24, 1
      %p189 = por %p187, %p188
      %p190 = scmp.ne.s32.totalorder %s181, %s182
      %p191 = scmp.eq.s32.totalorder %s24, 0
      %p192 = por %p190, %p191
      %p193 = scmp.ne.s32.totalorder %s181, %s182
      %p194 = scmp.eq.s32.totalorder %s25, 1
      %p195 = por %p193, %p194
      %p197 = scmp.ne.s32.totalorder %s182, %s196
      %p198 = scmp.eq.s32.totalorder %s25, 0
      %p199 = por %p197, %p198
      %s201 = sadd.s32 %s200, 1
      %p204 = scmp.eq.s32.totalorder %s19, 1
      %p205 = scmp.ne.s32.totalorder %s200, %s202
      %p206 = scmp.eq.s32.totalorder %s19, 0
      %p207 = por %p205, %p206
      %p208 = scmp.ne.s32.totalorder %s200, %s202
      %p209 = scmp.eq.s32.totalorder %s24, 1
      %p210 = por %p208, %p209
      %p211 = scmp.ne.s32.totalorder %s202, %s203
      %p212 = scmp.eq.s32.totalorder %s24, 0
      %p213 = por %p211, %p212
      %p214 = scmp.ne.s32.totalorder %s202, %s203
      %p215 = scmp.eq.s32.totalorder %s25, 1
      %p216 = por %p214, %p215
      %p218 = scmp.ne.s32.totalorder %s203, %s217
      %p219 = scmp.eq.s32.totalorder %s25, 0
      %p220 = por %p218, %p219
      %s221 = ssub.s32 %s19, %s26
      %p222 = scmp.eq.s32.totalorder %s221, 0
      %s224 = sadd.s32 %s223, 1
      %s225 = scalar_select %p222, %s223, %s224
      %p228 = pneg %p222
      %p229 = scmp.eq.s32.totalorder %s19, 1
      %p230 = por %p228, %p229
      %p231 = scmp.ne.s32.totalorder %s223, %s226
      %p232 = scmp.eq.s32.totalorder %s19, 0
      %p233 = por %p231, %p232
      %p234 = scmp.ne.s32.totalorder %s223, %s226
      %p235 = scmp.eq.s32.totalorder %s24, 1
      %p236 = por %p234, %p235
      %p237 = scmp.ne.s32.totalorder %s226, %s227
      %p238 = scmp.eq.s32.totalorder %s24, 0
      %p239 = por %p237, %p238
      %p240 = scmp.ne.s32.totalorder %s226, %s227
      %p241 = scmp.eq.s32.totalorder %s25, 1
      %p242 = por %p240, %p241
      %p244 = scmp.ne.s32.totalorder %s227, %s243
      %p245 = scmp.eq.s32.totalorder %s25, 0
      %p246 = por %p244, %p245
      %p247 = scmp.le.s32.totalorder 1, %s19
      %p248 = scmp.lt.s32.totalorder %s19, 3
      %p249 = pnand %p247, %p248
      %p250 = pneg %p249
      // Predicated region
      $region9: #{tpu_custom_call.1} parent=5 // pred_check
        _
      $region10: #{tpu_custom_call.1} parent=5 // pred_check_branch
        %252 = sbr.rel (%p249) target = $region12
      $region11: #{tpu_custom_call.1} parent=5 // pred_region
        %s253 = ssub.s32 %s19, 1
        // Predicated region
        $region13: #{tpu_custom_call.1} parent=11 // pred_check
          %p254 = pneg %p66
        $region14: #{tpu_custom_call.1} parent=11 // pred_check_branch
          %256 = sbr.rel (%p254) target = $region16
        $region15: #{tpu_custom_call.1} parent=11 // pred_region
          _
        $region16: #{tpu_custom_call.1} parent=11 // pred_fallthru
          _
        // Predicated region
        $region17: #{tpu_custom_call.1} parent=11 // pred_check
          %p257 = pneg %p87
        $region18: #{tpu_custom_call.1} parent=11 // pred_check_branch
          %259 = sbr.rel (%p257) target = $region20
        $region19: #{tpu_custom_call.1} parent=11 // pred_region
          %s261 = ssub.s32 64, 64
          %262 = vsyncadd [#allocation3], %s261
          %s264 = sshll.u32 [#allocation2], 4
          %s265 = int_to_ptr.vmem [resolvable:$true] %s264
          %267 = dma.hbm_to_vmem [thread:$0]  %s2, 64, %s265, [#allocation3]
        $region20: #{tpu_custom_call.1} parent=11 // pred_fallthru
          _
        // Predicated region
        $region21: #{tpu_custom_call.1} parent=11 // pred_check
          %p268 = pneg %p108
        $region22: #{tpu_custom_call.1} parent=11 // pred_check_branch
          %270 = sbr.rel (%p268) target = $region24
        $region23: #{tpu_custom_call.1} parent=11 // pred_region
          _
        $region24: #{tpu_custom_call.1} parent=11 // pred_fallthru
          _
        // Predicated region
        $region25: #{tpu_custom_call.1} parent=11 // pred_check
          %p271 = pneg %p129
        $region26: #{tpu_custom_call.1} parent=11 // pred_check_branch
          %273 = sbr.rel (%p271) target = $region28
        $region27: #{tpu_custom_call.1} parent=11 // pred_region
          _
        $region28: #{tpu_custom_call.1} parent=11 // pred_fallthru
          _
        // Predicated region
        $region29: #{tpu_custom_call.1} parent=11 // pred_check
          %p274 = pneg %p150
        $region30: #{tpu_custom_call.1} parent=11 // pred_check_branch
          %276 = sbr.rel (%p274) target = $region32
        $region31: #{tpu_custom_call.1} parent=11 // pred_region
          _
        $region32: #{tpu_custom_call.1} parent=11 // pred_fallthru
          _
        // Predicated region
        $region33: #{tpu_custom_call.1} parent=11 // pred_check
          %p277 = pneg %p171
        $region34: #{tpu_custom_call.1} parent=11 // pred_check_branch
          %279 = sbr.rel (%p277) target = $region36
        $region35: #{tpu_custom_call.1} parent=11 // pred_region
          _
        $region36: #{tpu_custom_call.1} parent=11 // pred_fallthru
          _
        // Predicated region
        $region37: #{tpu_custom_call.1} parent=11 // pred_check
          %p280 = pneg %p192
        $region38: #{tpu_custom_call.1} parent=11 // pred_check_branch
          %282 = sbr.rel (%p280) target = $region40
        $region39: #{tpu_custom_call.1} parent=11 // pred_region
          _
        $region40: #{tpu_custom_call.1} parent=11 // pred_fallthru
          _
        // Predicated region
        $region41: #{tpu_custom_call.1} parent=11 // pred_check
          %p283 = pneg %p213
        $region42: #{tpu_custom_call.1} parent=11 // pred_check_branch
          %285 = sbr.rel (%p283) target = $region44
        $region43: #{tpu_custom_call.1} parent=11 // pred_region
          _
        $region44: #{tpu_custom_call.1} parent=11 // pred_fallthru
          _
      $region12: #{tpu_custom_call.1} parent=5 // pred_fallthru
        _
      %p286 = scmp.lt.s32.totalorder %s19, 2
      // Predicated region
      $region45: #{tpu_custom_call.1} parent=5 // pred_check
        %p287 = pneg %p286
      $region46: #{tpu_custom_call.1} parent=5 // pred_check_branch
        %289 = sbr.rel (%p287) target = $region48
      $region47: #{tpu_custom_call.1} parent=5 // pred_region
        // Predicated region
        $region49: #{tpu_custom_call.1} parent=47 // pred_check
          %p290 = pneg %p39
        $region50: #{tpu_custom_call.1} parent=47 // pred_check_branch
          %292 = sbr.rel (%p290) target = $region52
        $region51: #{tpu_custom_call.1} parent=47 // pred_region
          %s293 = smul.u32 5, %s19
          %p294 = scmp.lt.s32.totalorder %s293, 9
          %s295 = scalar_select %p294, %s293, 9
          %s296 = smul.addr %s295, 4
          %s297 = scalar_lea.vmem %s0, %s296
          %s298 = smul.u32 5, %s19
        $region52: #{tpu_custom_call.1} parent=47 // pred_fallthru
          _
      $region48: #{tpu_custom_call.1} parent=5 // pred_fallthru
        _
      %p299 = scmp.le.s32.totalorder 1, %s19
      %p300 = scmp.lt.s32.totalorder %s19, 3
      %p301 = pnand %p299, %p300
      %p302 = pneg %p301
      // Predicated region
      $region53: #{tpu_custom_call.1} parent=5 // pred_check
        _
      $region54: #{tpu_custom_call.1} parent=5 // pred_check_branch
        %304 = sbr.rel (%p301) target = $region56
      $region55: #{tpu_custom_call.1} parent=5 // pred_region
        %s305 = ssub.s32 %s19, 1
        // Predicated region
        $region57: #{tpu_custom_call.1} parent=55 // pred_check
          %p306 = pneg %p87
        $region58: #{tpu_custom_call.1} parent=55 // pred_check_branch
          %308 = sbr.rel (%p306) target = $region60
        $region59: #{tpu_custom_call.1} parent=55 // pred_region
          %309 = dma.done [#allocation3], 64
        $region60: #{tpu_custom_call.1} parent=55 // pred_fallthru
          _
        %s310 = smul.u32 5, %s24
        %p311 = scmp.lt.s32.totalorder %s310, 9
        %s312 = scalar_select %p311, %s310, 9
        %s313 = smul.addr %s312, 4
        %s314 = scalar_lea.vmem %s0, %s313
        %p315 = pneg %p45
        %p316 = pneg %p42
        %p317 = pneg %p66
        %p318 = pneg %p63
        %p319 = pneg %p87
        %p320 = pneg %p84
        %p321 = pneg %p108
        %p322 = pneg %p105
        %p323 = pneg %p129
        %p324 = pneg %p126
        %p325 = pneg %p150
        %p326 = pneg %p147
        %p327 = pneg %p171
        %p328 = pneg %p168
        %p329 = pneg %p192
        %p330 = pneg %p189
        %p331 = pneg %p213
        %p332 = pneg %p210
        %p333 = pneg %p239
        %p334 = pneg %p236
        %s335 = sand.u32 %s226, 1
        %s336 = scalar_lea.sflag [#allocation4], %s335
        %s337 = sand.u32 %s226, 1
        %s338 = smul.addr %s337, 40
        %s339 = scalar_lea.vmem [#allocation5], %s338
        %s340 = smul.u32 5, %s24
        %p341 = scmp.lt.s32.totalorder %s340, 9
        %s342 = scalar_select %p341, %s340, 9
        %s343 = smul.addr %s342, 4
        %s344 = scalar_lea.vmem %s0, %s343
        %s345 = smul.u32 5, %s24
        %s346 = smul.u32 5, %s24
        %v348 = vld [vmem:[%s1] sm:$0xf]
        %v349 = vld [vmem:[%s1 + $0x4] sm:$0xf]
        %v350 = vld [vmem:[#allocation2] sm:$0xf]
        %v351 = vld [vmem:[%s3] sm:$0xf]
        %v352 = vld [vmem:[%s4] sm:$0xf]
        %v353 = vld [vmem:[%s5] sm:$0xf]
        %v354 = vld [vmem:[%s5 + $0x4] sm:$0xf]
        %v355 = vld [vmem:[%s6] sm:$0xf]
        %v356 = vld [vmem:[%s6 + $0x4] sm:$0xf]
        %v357 = vld [vmem:[%s7] sm:$0xff]
        %v358 = vld [vmem:[%s8] sm:$0xff]
        %v359 = vld [vmem:[%s8 + $0x8] sm:$0xff]
        %v360 = vld [vmem:[%s344] sm:$0xf]
        %v361 = vunpack.c.l.bf16 %v360
        %v364 = vunpack.c.l.b16 %v348
        %v365 = vunpack.c.l.b16 %v349
        %v366 = vpack.c.b16 %v365, %v364
        %vm368 = vcmask 130048
        %v370 = vsel %vm368, %v360, 0
        %372 = vmatprep.subr.bf16.mxu0 0
        %373 = vmatpush1.bf16.msra.mxu0 %v366
        %374 = vmatprep.subr.bf16.mxu0 0
        %375 = vmatpush1.bf16.msra.mxu0 0
        %376 = vmatprep.subr.bf16.mxu0 0
        %377 = vmatpush1.bf16.msra.mxu0 0
        %378 = vmatprep.subr.bf16.mxu0 0
        %379 = vmatpush1.bf16.msra.mxu0 0
        %380 = vmatprep.subr.bf16.mxu0 0
        %381 = vmatpush1.bf16.msra.mxu0 0
        %382 = vmatprep.subr.bf16.mxu0 0
        %383 = vmatpush1.bf16.msra.mxu0 0
        %384 = vmatprep.subr.bf16.mxu0 0
        %385 = vmatpush1.bf16.msra.mxu0 0
        %386 = vmatprep.subr.bf16.mxu0 0
        %387 = vmatpush1.bf16.msra.mxu0 0
        %388 = vmatprep.subr.bf16.mxu0 0
        %389 = vmatpush1.bf16.msra.mxu0 0
        %390 = vmatprep.subr.bf16.mxu0 0
        %391 = vmatpush1.bf16.msra.mxu0 0
        %392 = vmatprep.subr.bf16.mxu0 0
        %393 = vmatpush1.bf16.msra.mxu0 0
        %394 = vmatprep.subr.bf16.mxu0 0
        %395 = vmatpush1.bf16.msra.mxu0 0
        %396 = vmatprep.subr.bf16.mxu0 0
        %397 = vmatpush1.bf16.msra.mxu0 0
        %398 = vmatprep.subr.bf16.mxu0 0
        %399 = vmatpush1.bf16.msra.mxu0 0
        %400 = vmatprep.subr.bf16.mxu0 0
        %401 = vmatpush1.bf16.msra.mxu0 0
        %402 = vmatprep.subr.bf16.mxu0 0
        %403 = vmatpush1.bf16.msra.mxu0 0
        %404 = vmatprep.mubr.bf16.mxu0 0
        %405 = vmatmul.mubr.bf16.gmra.mrb[0].mxu0 %v370
        %v406 = vpop.f32.mrb[0].mxu0
        %v407 = vadd.f32 0.0, %v406
        %v408 = vpop.f32.mrb[0].mxu0
        %v409 = vpop.f32.mrb[0].mxu0
        %v410 = vpop.f32.mrb[0].mxu0
        %411 = vdwg.mxu0
        %vm412 = vcmp.gt.f32.partialorder %v407, 0.0
        %v413 = vmul.f32 %v407, 0.2
        %v414 = vsel %vm412, %v407, %v413
        %v415 = vpack.c.bf16 %v414, %v414
        %417 = vset.pattern.permute.xlu0 0
        %418 = vperm.xlu0 %417, %v357
        %v419 = vpop.permute.xlu0 %418
        %vm421 = vcmask 64512
        %v423 = vsel %vm421, %v350, 0
        %vm425 = vcmask 1043456
        %v427 = vsel %vm425, %v415, 0
        %429 = vmatprep.subr.bf16.mxu0 0
        %430 = vmatpush1.bf16.msra.mxu0 %v427
        %431 = vmatprep.subr.bf16.mxu0 0
        %432 = vmatpush1.bf16.msra.mxu0 0
        %433 = vmatprep.subr.bf16.mxu0 0
        %434 = vmatpush1.bf16.msra.mxu0 0
        %435 = vmatprep.subr.bf16.mxu0 0
        %436 = vmatpush1.bf16.msra.mxu0 0
        %437 = vmatprep.subr.bf16.mxu0 0
        %438 = vmatpush1.bf16.msra.mxu0 0
        %439 = vmatprep.subr.bf16.mxu0 0
        %440 = vmatpush1.bf16.msra.mxu0 0
        %441 = vmatprep.subr.bf16.mxu0 0
        %442 = vmatpush1.bf16.msra.mxu0 0
        %443 = vmatprep.subr.bf16.mxu0 0
        %444 = vmatpush1.bf16.msra.mxu0 0
        %445 = vmatprep.subr.bf16.mxu0 0
        %446 = vmatpush1.bf16.msra.mxu0 0
        %447 = vmatprep.subr.bf16.mxu0 0
        %448 = vmatpush1.bf16.msra.mxu0 0
        %449 = vmatprep.subr.bf16.mxu0 0
        %450 = vmatpush1.bf16.msra.mxu0 0
        %451 = vmatprep.subr.bf16.mxu0 0
        %452 = vmatpush1.bf16.msra.mxu0 0
        %453 = vmatprep.subr.bf16.mxu0 0
        %454 = vmatpush1.bf16.msra.mxu0 0
        %455 = vmatprep.subr.bf16.mxu0 0
        %456 = vmatpush1.bf16.msra.mxu0 0
        %457 = vmatprep.subr.bf16.mxu0 0
        %458 = vmatpush1.bf16.msra.mxu0 0
        %459 = vmatprep.subr.bf16.mxu0 0
        %460 = vmatpush1.bf16.msra.mxu0 0
        %461 = vmatprep.mubr.bf16.mxu0 0
        %462 = vmatmul.mubr.bf16.gmra.mrb[0].mxu0 %v423
        %v463 = vpop.f32.mrb[0].mxu0
        %v464 = vadd.f32 %v419, %v463
        %v465 = vpop.f32.mrb[0].mxu0
        %v466 = vpop.f32.mrb[0].mxu0
        %v467 = vpop.f32.mrb[0].mxu0
        %468 = vdwg.mxu0
        %vm469 = vcmp.gt.f32.partialorder %v464, 0.0
        %v470 = vmul.f32 %v464, 0.2
        %v471 = vsel %vm469, %v464, %v470
        %v472 = vadd.f32 %v361, %v471
        %v473 = vpack.c.bf16 %v472, %v472
        %v474 = vsel %vm368, %v472, 0.0
        %475 = vadd.xlane.f32.xlu0 %v474
        %v476 = vpop.xlane.xlu0 %475
        %v477 = vrcp.pop 16.0
        %v478 = vmul.f32 %v476, %v477
        %v479 = vpack.c.bf16 %v478, %v478
        %480 = vrot.lane.b32.xlu0 %v357, 127
        %v481 = vpop.permute.xlu0 %480
        %v484 = vsel %vm421, %v351, 0
        %v487 = vsel %vm425, %v479, 0
        %489 = vmatprep.subr.bf16.mxu0 0
        %490 = vmatpush1.bf16.msra.mxu0 %v487
        %491 = vmatprep.subr.bf16.mxu0 0
        %492 = vmatpush1.bf16.msra.mxu0 0
        %493 = vmatprep.subr.bf16.mxu0 0
        %494 = vmatpush1.bf16.msra.mxu0 0
        %495 = vmatprep.subr.bf16.mxu0 0
        %496 = vmatpush1.bf16.msra.mxu0 0
        %497 = vmatprep.subr.bf16.mxu0 0
        %498 = vmatpush1.bf16.msra.mxu0 0
        %499 = vmatprep.subr.bf16.mxu0 0
        %500 = vmatpush1.bf16.msra.mxu0 0
        %501 = vmatprep.subr.bf16.mxu0 0
        %502 = vmatpush1.bf16.msra.mxu0 0
        %503 = vmatprep.subr.bf16.mxu0 0
        %504 = vmatpush1.bf16.msra.mxu0 0
        %505 = vmatprep.subr.bf16.mxu0 0
        %506 = vmatpush1.bf16.msra.mxu0 0
        %507 = vmatprep.subr.bf16.mxu0 0
        %508 = vmatpush1.bf16.msra.mxu0 0
        %509 = vmatprep.subr.bf16.mxu0 0
        %510 = vmatpush1.bf16.msra.mxu0 0
        %511 = vmatprep.subr.bf16.mxu0 0
        %512 = vmatpush1.bf16.msra.mxu0 0
        %513 = vmatprep.subr.bf16.mxu0 0
        %514 = vmatpush1.bf16.msra.mxu0 0
        %515 = vmatprep.subr.bf16.mxu0 0
        %516 = vmatpush1.bf16.msra.mxu0 0
        %517 = vmatprep.subr.bf16.mxu0 0
        %518 = vmatpush1.bf16.msra.mxu0 0
        %519 = vmatprep.subr.bf16.mxu0 0
        %520 = vmatpush1.bf16.msra.mxu0 0
        %521 = vmatprep.mubr.bf16.mxu0 0
        %522 = vmatmul.mubr.bf16.gmra.mrb[0].mxu0 %v484
        %v523 = vpop.f32.mrb[0].mxu0
        %v524 = vadd.f32 %v481, %v523
        %v525 = vpop.f32.mrb[0].mxu0
        %v526 = vpop.f32.mrb[0].mxu0
        %v527 = vpop.f32.mrb[0].mxu0
        %528 = vdwg.mxu0
        %vm529 = vcmp.gt.f32.partialorder %v524, 0.0
        %v530 = vmul.f32 %v524, 0.2
        %v531 = vsel %vm529, %v524, %v530
        %v532 = vpack.c.bf16 %v531, %v531
        %v535 = vunpack.c.l.b16 %v353
        %v536 = vunpack.c.l.b16 %v354
        %v537 = vpack.c.b16 %v536, %v535
        %v539 = vsel %vm421, %v537, 0
        %v542 = vsel %vm425, %v532, 0
        %544 = vmatprep.subr.bf16.mxu0 0
        %545 = vmatpush1.bf16.msra.mxu0 %v542
        %546 = vmatprep.subr.bf16.mxu0 0
        %547 = vmatpush1.bf16.msra.mxu0 0
        %548 = vmatprep.subr.bf16.mxu0 0
        %549 = vmatpush1.bf16.msra.mxu0 0
        %550 = vmatprep.subr.bf16.mxu0 0
        %551 = vmatpush1.bf16.msra.mxu0 0
        %552 = vmatprep.subr.bf16.mxu0 0
        %553 = vmatpush1.bf16.msra.mxu0 0
        %554 = vmatprep.subr.bf16.mxu0 0
        %555 = vmatpush1.bf16.msra.mxu0 0
        %556 = vmatprep.subr.bf16.mxu0 0
        %557 = vmatpush1.bf16.msra.mxu0 0
        %558 = vmatprep.subr.bf16.mxu0 0
        %559 = vmatpush1.bf16.msra.mxu0 0
        %560 = vmatprep.subr.bf16.mxu0 0
        %561 = vmatpush1.bf16.msra.mxu0 0
        %562 = vmatprep.subr.bf16.mxu0 0
        %563 = vmatpush1.bf16.msra.mxu0 0
        %564 = vmatprep.subr.bf16.mxu0 0
        %565 = vmatpush1.bf16.msra.mxu0 0
        %566 = vmatprep.subr.bf16.mxu0 0
        %567 = vmatpush1.bf16.msra.mxu0 0
        %568 = vmatprep.subr.bf16.mxu0 0
        %569 = vmatpush1.bf16.msra.mxu0 0
        %570 = vmatprep.subr.bf16.mxu0 0
        %571 = vmatpush1.bf16.msra.mxu0 0
        %572 = vmatprep.subr.bf16.mxu0 0
        %573 = vmatpush1.bf16.msra.mxu0 0
        %574 = vmatprep.subr.bf16.mxu0 0
        %575 = vmatpush1.bf16.msra.mxu0 0
        %576 = vmatprep.mubr.bf16.mxu0 0
        %577 = vmatmul.mubr.bf16.gmra.mrb[0].mxu0 %v539
        %v578 = vpop.f32.mrb[0].mxu0
        %v579 = vadd.f32 %v358, %v578
        %v580 = vpop.f32.mrb[0].mxu0
        %v581 = vpop.f32.mrb[0].mxu0
        %v582 = vadd.f32 %v359, %v581
        %v583 = vpop.f32.mrb[0].mxu0
        %584 = vdwg.mxu0
        %586 = vset.pattern.permute.xlu0 0
        %587 = vperm.xlu0 %586, %v579
        %v588 = vpop.permute.xlu0 %587
        %591 = vset.pattern.permute.xlu0 0
        %592 = vperm.xlu0 %591, %v582
        %v593 = vpop.permute.xlu0 %592
        %v597 = vunpack.c.l.b16 %v355
        %v598 = vunpack.c.l.b16 %v356
        %v599 = vpack.c.b16 %v598, %v597
        %v601 = vsel %vm421, %v599, 0
        %v604 = vsel %vm425, %v473, 0
        %606 = vmatprep.subr.bf16.mxu0 0
        %607 = vmatpush1.bf16.msra.mxu0 %v604
        %608 = vmatprep.subr.bf16.mxu0 0
        %609 = vmatpush1.bf16.msra.mxu0 0
        %610 = vmatprep.subr.bf16.mxu0 0
        %611 = vmatpush1.bf16.msra.mxu0 0
        %612 = vmatprep.subr.bf16.mxu0 0
        %613 = vmatpush1.bf16.msra.mxu0 0
        %614 = vmatprep.subr.bf16.mxu0 0
        %615 = vmatpush1.bf16.msra.mxu0 0
        %616 = vmatprep.subr.bf16.mxu0 0
        %617 = vmatpush1.bf16.msra.mxu0 0
        %618 = vmatprep.subr.bf16.mxu0 0
        %619 = vmatpush1.bf16.msra.mxu0 0
        %620 = vmatprep.subr.bf16.mxu0 0
        %621 = vmatpush1.bf16.msra.mxu0 0
        %622 = vmatprep.subr.bf16.mxu0 0
        %623 = vmatpush1.bf16.msra.mxu0 0
        %624 = vmatprep.subr.bf16.mxu0 0
        %625 = vmatpush1.bf16.msra.mxu0 0
        %626 = vmatprep.subr.bf16.mxu0 0
        %627 = vmatpush1.bf16.msra.mxu0 0
        %628 = vmatprep.subr.bf16.mxu0 0
        %629 = vmatpush1.bf16.msra.mxu0 0
        %630 = vmatprep.subr.bf16.mxu0 0
        %631 = vmatpush1.bf16.msra.mxu0 0
        %632 = vmatprep.subr.bf16.mxu0 0
        %633 = vmatpush1.bf16.msra.mxu0 0
        %634 = vmatprep.subr.bf16.mxu0 0
        %635 = vmatpush1.bf16.msra.mxu0 0
        %636 = vmatprep.subr.bf16.mxu0 0
        %637 = vmatpush1.bf16.msra.mxu0 0
        %638 = vmatprep.mubr.bf16.mxu0 0
        %639 = vmatmul.mubr.bf16.gmra.mrb[0].mxu0 %v601
        %v640 = vpop.f32.mrb[0].mxu0
        %v641 = vadd.f32 %v588, %v640
        %v642 = vpop.f32.mrb[0].mxu0
        %v643 = vpop.f32.mrb[0].mxu0
        %v644 = vadd.f32 %v593, %v643
        %v645 = vpop.f32.mrb[0].mxu0
        %646 = vdwg.mxu0
        %v647 = vsub.f32 0.0, %v641
        %v648 = vsub.f32 0.0, %v644
        %v649 = vmul.f32 %v647, 1.442695
        %v650 = vpow.pop %v649
        %v651 = vmul.f32 %v648, 1.442695
        %v652 = vpow.pop %v651
        %v653 = vadd.f32 %v650, 1.0
        %v654 = vadd.f32 %v652, 1.0
        %v655 = vrcp.pop %v653
        %v656 = vrcp.pop %v654
        %v657 = vpack.c.bf16 %v656, %v655
        %v658 = vsel %vm368, %v473, 0
        %660 = vmatprep.subr.bf16.mxu0 0
        %661 = vmatpush1.bf16.msra.mxu0 %v657
        %662 = vmatprep.subr.bf16.mxu0 0
        %663 = vmatpush1.bf16.msra.mxu0 0
        %664 = vmatprep.subr.bf16.mxu0 0
        %665 = vmatpush1.bf16.msra.mxu0 0
        %666 = vmatprep.subr.bf16.mxu0 0
        %667 = vmatpush1.bf16.msra.mxu0 0
        %668 = vmatprep.subr.bf16.mxu0 0
        %669 = vmatpush1.bf16.msra.mxu0 0
        %670 = vmatprep.subr.bf16.mxu0 0
        %671 = vmatpush1.bf16.msra.mxu0 0
        %672 = vmatprep.subr.bf16.mxu0 0
        %673 = vmatpush1.bf16.msra.mxu0 0
        %674 = vmatprep.subr.bf16.mxu0 0
        %675 = vmatpush1.bf16.msra.mxu0 0
        %676 = vmatprep.subr.bf16.mxu0 0
        %677 = vmatpush1.bf16.msra.mxu0 0
        %678 = vmatprep.subr.bf16.mxu0 0
        %679 = vmatpush1.bf16.msra.mxu0 0
        %680 = vmatprep.subr.bf16.mxu0 0
        %681 = vmatpush1.bf16.msra.mxu0 0
        %682 = vmatprep.subr.bf16.mxu0 0
        %683 = vmatpush1.bf16.msra.mxu0 0
        %684 = vmatprep.subr.bf16.mxu0 0
        %685 = vmatpush1.bf16.msra.mxu0 0
        %686 = vmatprep.subr.bf16.mxu0 0
        %687 = vmatpush1.bf16.msra.mxu0 0
        %688 = vmatprep.subr.bf16.mxu0 0
        %689 = vmatpush1.bf16.msra.mxu0 0
        %690 = vmatprep.subr.bf16.mxu0 0
        %691 = vmatpush1.bf16.msra.mxu0 0
        %692 = vmatprep.mubr.bf16.mxu0 0
        %693 = vmatmul.mubr.bf16.gmra.mrb[0].mxu0 %v658
        %v694 = vpop.f32.mrb[0].mxu0
        %v695 = vadd.f32 0.0, %v694
        %v696 = vpop.f32.mrb[0].mxu0
        %v697 = vpop.f32.mrb[0].mxu0
        %v698 = vpop.f32.mrb[0].mxu0
        %699 = vdwg.mxu0
        %vm700 = vcmp.gt.f32.partialorder %v695, 0.0
        %v701 = vmul.f32 %v695, 0.2
        %v702 = vsel %vm700, %v695, %v701
        %v703 = vpack.c.bf16 %v702, %v702
        %704 = vset.pattern.permute.xlu0 2
        %705 = vperm.xlu0 %704, %v357
        %v706 = vpop.permute.xlu0 %705
        %v709 = vsel %vm421, %v352, 0
        %v712 = vsel %vm425, %v703, 0
        %714 = vmatprep.subr.bf16.mxu0 0
        %715 = vmatpush1.bf16.msra.mxu0 %v712
        %716 = vmatprep.subr.bf16.mxu0 0
        %717 = vmatpush1.bf16.msra.mxu0 0
        %718 = vmatprep.subr.bf16.mxu0 0
        %719 = vmatpush1.bf16.msra.mxu0 0
        %720 = vmatprep.subr.bf16.mxu0 0
        %721 = vmatpush1.bf16.msra.mxu0 0
        %722 = vmatprep.subr.bf16.mxu0 0
        %723 = vmatpush1.bf16.msra.mxu0 0
        %724 = vmatprep.subr.bf16.mxu0 0
        %725 = vmatpush1.bf16.msra.mxu0 0
        %726 = vmatprep.subr.bf16.mxu0 0
        %727 = vmatpush1.bf16.msra.mxu0 0
        %728 = vmatprep.subr.bf16.mxu0 0
        %729 = vmatpush1.bf16.msra.mxu0 0
        %730 = vmatprep.subr.bf16.mxu0 0
        %731 = vmatpush1.bf16.msra.mxu0 0
        %732 = vmatprep.subr.bf16.mxu0 0
        %733 = vmatpush1.bf16.msra.mxu0 0
        %734 = vmatprep.subr.bf16.mxu0 0
        %735 = vmatpush1.bf16.msra.mxu0 0
        %736 = vmatprep.subr.bf16.mxu0 0
        %737 = vmatpush1.bf16.msra.mxu0 0
        %738 = vmatprep.subr.bf16.mxu0 0
        %739 = vmatpush1.bf16.msra.mxu0 0
        %740 = vmatprep.subr.bf16.mxu0 0
        %741 = vmatpush1.bf16.msra.mxu0 0
        %742 = vmatprep.subr.bf16.mxu0 0
        %743 = vmatpush1.bf16.msra.mxu0 0
        %744 = vmatprep.subr.bf16.mxu0 0
        %745 = vmatpush1.bf16.msra.mxu0 0
        %746 = vmatprep.mubr.bf16.mxu0 0
        %747 = vmatmul.mubr.bf16.gmra.mrb[0].mxu0 %v709
        %v748 = vpop.f32.mrb[0].mxu0
        %v749 = vadd.f32 %v706, %v748
        %v750 = vpop.f32.mrb[0].mxu0
        %v751 = vpop.f32.mrb[0].mxu0
        %v752 = vpop.f32.mrb[0].mxu0
        %753 = vdwg.mxu0
        %vm754 = vcmp.gt.f32.partialorder %v749, 0.0
        %v755 = vmul.f32 %v749, 0.2
        %v756 = vsel %vm754, %v749, %v755
        %757 = vst.msk [vmem:[%s339] sm:$0xff] %vm368, %v756
        %s758 = scalar_lea.vmem %s344, 4
        %v759 = vld [vmem:[%s758] sm:$0xf]
        %v760 = vunpack.c.l.bf16 %v759
        %v762 = vsel %vm368, %v759, 0
        %764 = vmatprep.subr.bf16.mxu0 0
        %765 = vmatpush1.bf16.msra.mxu0 %v366
        %766 = vmatprep.subr.bf16.mxu0 0
        %767 = vmatpush1.bf16.msra.mxu0 0
        %768 = vmatprep.subr.bf16.mxu0 0
        %769 = vmatpush1.bf16.msra.mxu0 0
        %770 = vmatprep.subr.bf16.mxu0 0
        %771 = vmatpush1.bf16.msra.mxu0 0
        %772 = vmatprep.subr.bf16.mxu0 0
        %773 = vmatpush1.bf16.msra.mxu0 0
        %774 = vmatprep.subr.bf16.mxu0 0
        %775 = vmatpush1.bf16.msra.mxu0 0
        %776 = vmatprep.subr.bf16.mxu0 0
        %777 = vmatpush1.bf16.msra.mxu0 0
        %778 = vmatprep.subr.bf16.mxu0 0
        %779 = vmatpush1.bf16.msra.mxu0 0
        %780 = vmatprep.subr.bf16.mxu0 0
        %781 = vmatpush1.bf16.msra.mxu0 0
        %782 = vmatprep.subr.bf16.mxu0 0
        %783 = vmatpush1.bf16.msra.mxu0 0
        %784 = vmatprep.subr.bf16.mxu0 0
        %785 = vmatpush1.bf16.msra.mxu0 0
        %786 = vmatprep.subr.bf16.mxu0 0
        %787 = vmatpush1.bf16.msra.mxu0 0
        %788 = vmatprep.subr.bf16.mxu0 0
        %789 = vmatpush1.bf16.msra.mxu0 0
        %790 = vmatprep.subr.bf16.mxu0 0
        %791 = vmatpush1.bf16.msra.mxu0 0
        %792 = vmatprep.subr.bf16.mxu0 0
        %793 = vmatpush1.bf16.msra.mxu0 0
        %794 = vmatprep.subr.bf16.mxu0 0
        %795 = vmatpush1.bf16.msra.mxu0 0
        %796 = vmatprep.mubr.bf16.mxu0 0
        %797 = vmatmul.mubr.bf16.gmra.mrb[0].mxu0 %v762
        %v798 = vpop.f32.mrb[0].mxu0
        %v799 = vadd.f32 0.0, %v798
        %v800 = vpop.f32.mrb[0].mxu0
        %v801 = vpop.f32.mrb[0].mxu0
        %v802 = vpop.f32.mrb[0].mxu0
        %803 = vdwg.mxu0
        %vm804 = vcmp.gt.f32.partialorder %v799, 0.0
        %v805 = vmul.f32 %v799, 0.2
        %v806 = vsel %vm804, %v799, %v805
        %v807 = vpack.c.bf16 %v806, %v806
        %v809 = vsel %vm425, %v807, 0
        %811 = vmatprep.subr.bf16.mxu0 0
        %812 = vmatpush1.bf16.msra.mxu0 %v809
        %813 = vmatprep.subr.bf16.mxu0 0
        %814 = vmatpush1.bf16.msra.mxu0 0
        %815 = vmatprep.subr.bf16.mxu0 0
        %816 = vmatpush1.bf16.msra.mxu0 0
        %817 = vmatprep.subr.bf16.mxu0 0
        %818 = vmatpush1.bf16.msra.mxu0 0
        %819 = vmatprep.subr.bf16.mxu0 0
        %820 = vmatpush1.bf16.msra.mxu0 0
        %821 = vmatprep.subr.bf16.mxu0 0
        %822 = vmatpush1.bf16.msra.mxu0 0
        %823 = vmatprep.subr.bf16.mxu0 0
        %824 = vmatpush1.bf16.msra.mxu0 0
        %825 = vmatprep.subr.bf16.mxu0 0
        %826 = vmatpush1.bf16.msra.mxu0 0
        %827 = vmatprep.subr.bf16.mxu0 0
        %828 = vmatpush1.bf16.msra.mxu0 0
        %829 = vmatprep.subr.bf16.mxu0 0
        %830 = vmatpush1.bf16.msra.mxu0 0
        %831 = vmatprep.subr.bf16.mxu0 0
        %832 = vmatpush1.bf16.msra.mxu0 0
        %833 = vmatprep.subr.bf16.mxu0 0
        %834 = vmatpush1.bf16.msra.mxu0 0
        %835 = vmatprep.subr.bf16.mxu0 0
        %836 = vmatpush1.bf16.msra.mxu0 0
        %837 = vmatprep.subr.bf16.mxu0 0
        %838 = vmatpush1.bf16.msra.mxu0 0
        %839 = vmatprep.subr.bf16.mxu0 0
        %840 = vmatpush1.bf16.msra.mxu0 0
        %841 = vmatprep.subr.bf16.mxu0 0
        %842 = vmatpush1.bf16.msra.mxu0 0
        %843 = vmatprep.mubr.bf16.mxu0 0
        %844 = vmatmul.mubr.bf16.gmra.mrb[0].mxu0 %v423
        %v845 = vpop.f32.mrb[0].mxu0
        %v846 = vadd.f32 %v419, %v845
        %v847 = vpop.f32.mrb[0].mxu0
        %v848 = vpop.f32.mrb[0].mxu0
        %v849 = vpop.f32.mrb[0].mxu0
        %850 = vdwg.mxu0
        %vm851 = vcmp.gt.f32.partialorder %v846, 0.0
        %v852 = vmul.f32 %v846, 0.2
        %v853 = vsel %vm851, %v846, %v852
        %v854 = vadd.f32 %v760, %v853
        %v855 = vpack.c.bf16 %v854, %v854
        %v856 = vsel %vm368, %v854, 0.0
        %857 = vadd.xlane.f32.xlu0 %v856
        %v858 = vpop.xlane.xlu0 %857
        %v859 = vmul.f32 %v858, %v477
        %v860 = vpack.c.bf16 %v859, %v859
        %v862 = vsel %vm425, %v860, 0
        %864 = vmatprep.subr.bf16.mxu0 0
        %865 = vmatpush1.bf16.msra.mxu0 %v862
        %866 = vmatprep.subr.bf16.mxu0 0
        %867 = vmatpush1.bf16.msra.mxu0 0
        %868 = vmatprep.subr.bf16.mxu0 0
        %869 = vmatpush1.bf16.msra.mxu0 0
        %870 = vmatprep.subr.bf16.mxu0 0
        %871 = vmatpush1.bf16.msra.mxu0 0
        %872 = vmatprep.subr.bf16.mxu0 0
        %873 = vmatpush1.bf16.msra.mxu0 0
        %874 = vmatprep.subr.bf16.mxu0 0
        %875 = vmatpush1.bf16.msra.mxu0 0
        %876 = vmatprep.subr.bf16.mxu0 0
        %877 = vmatpush1.bf16.msra.mxu0 0
        %878 = vmatprep.subr.bf16.mxu0 0
        %879 = vmatpush1.bf16.msra.mxu0 0
        %880 = vmatprep.subr.bf16.mxu0 0
        %881 = vmatpush1.bf16.msra.mxu0 0
        %882 = vmatprep.subr.bf16.mxu0 0
        %883 = vmatpush1.bf16.msra.mxu0 0
        %884 = vmatprep.subr.bf16.mxu0 0
        %885 = vmatpush1.bf16.msra.mxu0 0
        %886 = vmatprep.subr.bf16.mxu0 0
        %887 = vmatpush1.bf16.msra.mxu0 0
        %888 = vmatprep.subr.bf16.mxu0 0
        %889 = vmatpush1.bf16.msra.mxu0 0
        %890 = vmatprep.subr.bf16.mxu0 0
        %891 = vmatpush1.bf16.msra.mxu0 0
        %892 = vmatprep.subr.bf16.mxu0 0
        %893 = vmatpush1.bf16.msra.mxu0 0
        %894 = vmatprep.subr.bf16.mxu0 0
        %895 = vmatpush1.bf16.msra.mxu0 0
        %896 = vmatprep.mubr.bf16.mxu0 0
        %897 = vmatmul.mubr.bf16.gmra.mrb[0].mxu0 %v484
        %v898 = vpop.f32.mrb[0].mxu0
        %v899 = vadd.f32 %v481, %v898
        %v900 = vpop.f32.mrb[0].mxu0
        %v901 = vpop.f32.mrb[0].mxu0
        %v902 = vpop.f32.mrb[0].mxu0
        %903 = vdwg.mxu0
        %vm904 = vcmp.gt.f32.partialorder %v899, 0.0
        %v905 = vmul.f32 %v899, 0.2
        %v906 = vsel %vm904, %v899, %v905
        %v907 = vpack.c.bf16 %v906, %v906
        %v909 = vsel %vm425, %v907, 0
        %911 = vmatprep.subr.bf16.mxu0 0
        %912 = vmatpush1.bf16.msra.mxu0 %v909
        %913 = vmatprep.subr.bf16.mxu0 0
        %914 = vmatpush1.bf16.msra.mxu0 0
        %915 = vmatprep.subr.bf16.mxu0 0
        %916 = vmatpush1.bf16.msra.mxu0 0
        %917 = vmatprep.subr.bf16.mxu0 0
        %918 = vmatpush1.bf16.msra.mxu0 0
        %919 = vmatprep.subr.bf16.mxu0 0
        %920 = vmatpush1.bf16.msra.mxu0 0
        %921 = vmatprep.subr.bf16.mxu0 0
        %922 = vmatpush1.bf16.msra.mxu0 0
        %923 = vmatprep.subr.bf16.mxu0 0
        %924 = vmatpush1.bf16.msra.mxu0 0
        %925 = vmatprep.subr.bf16.mxu0 0
        %926 = vmatpush1.bf16.msra.mxu0 0
        %927 = vmatprep.subr.bf16.mxu0 0
        %928 = vmatpush1.bf16.msra.mxu0 0
        %929 = vmatprep.subr.bf16.mxu0 0
        %930 = vmatpush1.bf16.msra.mxu0 0
        %931 = vmatprep.subr.bf16.mxu0 0
        %932 = vmatpush1.bf16.msra.mxu0 0
        %933 = vmatprep.subr.bf16.mxu0 0
        %934 = vmatpush1.bf16.msra.mxu0 0
        %935 = vmatprep.subr.bf16.mxu0 0
        %936 = vmatpush1.bf16.msra.mxu0 0
        %937 = vmatprep.subr.bf16.mxu0 0
        %938 = vmatpush1.bf16.msra.mxu0 0
        %939 = vmatprep.subr.bf16.mxu0 0
        %940 = vmatpush1.bf16.msra.mxu0 0
        %941 = vmatprep.subr.bf16.mxu0 0
        %942 = vmatpush1.bf16.msra.mxu0 0
        %943 = vmatprep.mubr.bf16.mxu0 0
        %944 = vmatmul.mubr.bf16.gmra.mrb[0].mxu0 %v539
        %v945 = vpop.f32.mrb[0].mxu0
        %v946 = vadd.f32 %v358, %v945
        %v947 = vpop.f32.mrb[0].mxu0
        %v948 = vpop.f32.mrb[0].mxu0
        %v949 = vadd.f32 %v359, %v948
        %v950 = vpop.f32.mrb[0].mxu0
        %951 = vdwg.mxu0
        %953 = vset.pattern.permute.xlu0 0
        %954 = vperm.xlu0 %953, %v946
        %v955 = vpop.permute.xlu0 %954
        %958 = vset.pattern.permute.xlu0 0
        %959 = vperm.xlu0 %958, %v949
        %v960 = vpop.permute.xlu0 %959
        %v963 = vsel %vm425, %v855, 0
        %965 = vmatprep.subr.bf16.mxu0 0
        %966 = vmatpush1.bf16.msra.mxu0 %v963
        %967 = vmatprep.subr.bf16.mxu0 0
        %968 = vmatpush1.bf16.msra.mxu0 0
        %969 = vmatprep.subr.bf16.mxu0 0
        %970 = vmatpush1.bf16.msra.mxu0 0
        %971 = vmatprep.subr.bf16.mxu0 0
        %972 = vmatpush1.bf16.msra.mxu0 0
        %973 = vmatprep.subr.bf16.mxu0 0
        %974 = vmatpush1.bf16.msra.mxu0 0
        %975 = vmatprep.subr.bf16.mxu0 0
        %976 = vmatpush1.bf16.msra.mxu0 0
        %977 = vmatprep.subr.bf16.mxu0 0
        %978 = vmatpush1.bf16.msra.mxu0 0
        %979 = vmatprep.subr.bf16.mxu0 0
        %980 = vmatpush1.bf16.msra.mxu0 0
        %981 = vmatprep.subr.bf16.mxu0 0
        %982 = vmatpush1.bf16.msra.mxu0 0
        %983 = vmatprep.subr.bf16.mxu0 0
        %984 = vmatpush1.bf16.msra.mxu0 0
        %985 = vmatprep.subr.bf16.mxu0 0
        %986 = vmatpush1.bf16.msra.mxu0 0
        %987 = vmatprep.subr.bf16.mxu0 0
        %988 = vmatpush1.bf16.msra.mxu0 0
        %989 = vmatprep.subr.bf16.mxu0 0
        %990 = vmatpush1.bf16.msra.mxu0 0
        %991 = vmatprep.subr.bf16.mxu0 0
        %992 = vmatpush1.bf16.msra.mxu0 0
        %993 = vmatprep.subr.bf16.mxu0 0
        %994 = vmatpush1.bf16.msra.mxu0 0
        %995 = vmatprep.subr.bf16.mxu0 0
        %996 = vmatpush1.bf16.msra.mxu0 0
        %997 = vmatprep.mubr.bf16.mxu0 0
        %998 = vmatmul.mubr.bf16.gmra.mrb[0].mxu0 %v601
        %v999 = vpop.f32.mrb[0].mxu0
        %v1000 = vadd.f32 %v955, %v999
        %v1001 = vpop.f32.mrb[0].mxu0
        %v1002 = vpop.f32.mrb[0].mxu0
        %v1003 = vadd.f32 %v960, %v1002
        %v1004 = vpop.f32.mrb[0].mxu0
        %1005 = vdwg.mxu0
        %v1006 = vsub.f32 0.0, %v1000
        %v1007 = vsub.f32 0.0, %v1003
        %v1008 = vmul.f32 %v1006, 1.442695
        %v1009 = vpow.pop %v1008
        %v1010 = vmul.f32 %v1007, 1.442695
        %v1011 = vpow.pop %v1010
        %v1012 = vadd.f32 %v1009, 1.0
        %v1013 = vadd.f32 %v1011, 1.0
        %v1014 = vrcp.pop %v1012
        %v1015 = vrcp.pop %v1013
        %v1016 = vpack.c.bf16 %v1015, %v1014
        %v1017 = vsel %vm368, %v855, 0
        %1019 = vmatprep.subr.bf16.mxu0 0
        %1020 = vmatpush1.bf16.msra.mxu0 %v1016
        %1021 = vmatprep.subr.bf16.mxu0 0
        %1022 = vmatpush1.bf16.msra.mxu0 0
        %1023 = vmatprep.subr.bf16.mxu0 0
        %1024 = vmatpush1.bf16.msra.mxu0 0
        %1025 = vmatprep.subr.bf16.mxu0 0
        %1026 = vmatpush1.bf16.msra.mxu0 0
        %1027 = vmatprep.subr.bf16.mxu0 0
        %1028 = vmatpush1.bf16.msra.mxu0 0
        %1029 = vmatprep.subr.bf16.mxu0 0
        %1030 = vmatpush1.bf16.msra.mxu0 0
        %1031 = vmatprep.subr.bf16.mxu0 0
        %1032 = vmatpush1.bf16.msra.mxu0 0
        %1033 = vmatprep.subr.bf16.mxu0 0
        %1034 = vmatpush1.bf16.msra.mxu0 0
        %1035 = vmatprep.subr.bf16.mxu0 0
        %1036 = vmatpush1.bf16.msra.mxu0 0
        %1037 = vmatprep.subr.bf16.mxu0 0
        %1038 = vmatpush1.bf16.msra.mxu0 0
        %1039 = vmatprep.subr.bf16.mxu0 0
        %1040 = vmatpush1.bf16.msra.mxu0 0
        %1041 = vmatprep.subr.bf16.mxu0 0
        %1042 = vmatpush1.bf16.msra.mxu0 0
        %1043 = vmatprep.subr.bf16.mxu0 0
        %1044 = vmatpush1.bf16.msra.mxu0 0
        %1045 = vmatprep.subr.bf16.mxu0 0
        %1046 = vmatpush1.bf16.msra.mxu0 0
        %1047 = vmatprep.subr.bf16.mxu0 0
        %1048 = vmatpush1.bf16.msra.mxu0 0
        %1049 = vmatprep.subr.bf16.mxu0 0
        %1050 = vmatpush1.bf16.msra.mxu0 0
        %1051 = vmatprep.mubr.bf16.mxu0 0
        %1052 = vmatmul.mubr.bf16.gmra.mrb[0].mxu0 %v1017
        %v1053 = vpop.f32.mrb[0].mxu0
        %v1054 = vadd.f32 0.0, %v1053
        %v1055 = vpop.f32.mrb[0].mxu0
        %v1056 = vpop.f32.mrb[0].mxu0
        %v1057 = vpop.f32.mrb[0].mxu0
        %1058 = vdwg.mxu0
        %vm1059 = vcmp.gt.f32.partialorder %v1054, 0.0
        %v1060 = vmul.f32 %v1054, 0.2
        %v1061 = vsel %vm1059, %v1054, %v1060
        %v1062 = vpack.c.bf16 %v1061, %v1061
        %v1064 = vsel %vm425, %v1062, 0
        %1066 = vmatprep.subr.bf16.mxu0 0
        %1067 = vmatpush1.bf16.msra.mxu0 %v1064
        %1068 = vmatprep.subr.bf16.mxu0 0
        %1069 = vmatpush1.bf16.msra.mxu0 0
        %1070 = vmatprep.subr.bf16.mxu0 0
        %1071 = vmatpush1.bf16.msra.mxu0 0
        %1072 = vmatprep.subr.bf16.mxu0 0
        %1073 = vmatpush1.bf16.msra.mxu0 0
        %1074 = vmatprep.subr.bf16.mxu0 0
        %1075 = vmatpush1.bf16.msra.mxu0 0
        %1076 = vmatprep.subr.bf16.mxu0 0
        %1077 = vmatpush1.bf16.msra.mxu0 0
        %1078 = vmatprep.subr.bf16.mxu0 0
        %1079 = vmatpush1.bf16.msra.mxu0 0
        %1080 = vmatprep.subr.bf16.mxu0 0
        %1081 = vmatpush1.bf16.msra.mxu0 0
        %1082 = vmatprep.subr.bf16.mxu0 0
        %1083 = vmatpush1.bf16.msra.mxu0 0
        %1084 = vmatprep.subr.bf16.mxu0 0
        %1085 = vmatpush1.bf16.msra.mxu0 0
        %1086 = vmatprep.subr.bf16.mxu0 0
        %1087 = vmatpush1.bf16.msra.mxu0 0
        %1088 = vmatprep.subr.bf16.mxu0 0
        %1089 = vmatpush1.bf16.msra.mxu0 0
        %1090 = vmatprep.subr.bf16.mxu0 0
        %1091 = vmatpush1.bf16.msra.mxu0 0
        %1092 = vmatprep.subr.bf16.mxu0 0
        %1093 = vmatpush1.bf16.msra.mxu0 0
        %1094 = vmatprep.subr.bf16.mxu0 0
        %1095 = vmatpush1.bf16.msra.mxu0 0
        %1096 = vmatprep.subr.bf16.mxu0 0
        %1097 = vmatpush1.bf16.msra.mxu0 0
        %1098 = vmatprep.mubr.bf16.mxu0 0
        %1099 = vmatmul.mubr.bf16.gmra.mrb[0].mxu0 %v709
        %v1100 = vpop.f32.mrb[0].mxu0
        %v1101 = vadd.f32 %v706, %v1100
        %v1102 = vpop.f32.mrb[0].mxu0
        %v1103 = vpop.f32.mrb[0].mxu0
        %v1104 = vpop.f32.mrb[0].mxu0
        %1105 = vdwg.mxu0
        %vm1106 = vcmp.gt.f32.partialorder %v1101, 0.0
        %v1107 = vmul.f32 %v1101, 0.2
        %v1108 = vsel %vm1106, %v1101, %v1107
        %s1109 = scalar_lea.vmem %s339, 8 [#allocation5]
        %1110 = vst.msk [vmem:[%s1109] sm:$0xff] %vm368, %v1108
        %s1111 = scalar_lea.vmem %s344, 8
        %v1112 = vld [vmem:[%s1111] sm:$0xf]
        %v1113 = vunpack.c.l.bf16 %v1112
        %v1115 = vsel %vm368, %v1112, 0
        %1117 = vmatprep.subr.bf16.mxu0 0
        %1118 = vmatpush1.bf16.msra.mxu0 %v366
        %1119 = vmatprep.subr.bf16.mxu0 0
        %1120 = vmatpush1.bf16.msra.mxu0 0
        %1121 = vmatprep.subr.bf16.mxu0 0
        %1122 = vmatpush1.bf16.msra.mxu0 0
        %1123 = vmatprep.subr.bf16.mxu0 0
        %1124 = vmatpush1.bf16.msra.mxu0 0
        %1125 = vmatprep.subr.bf16.mxu0 0
        %1126 = vmatpush1.bf16.msra.mxu0 0
        %1127 = vmatprep.subr.bf16.mxu0 0
        %1128 = vmatpush1.bf16.msra.mxu0 0
        %1129 = vmatprep.subr.bf16.mxu0 0
        %1130 = vmatpush1.bf16.msra.mxu0 0
        %1131 = vmatprep.subr.bf16.mxu0 0
        %1132 = vmatpush1.bf16.msra.mxu0 0
        %1133 = vmatprep.subr.bf16.mxu0 0
        %1134 = vmatpush1.bf16.msra.mxu0 0
        %1135 = vmatprep.subr.bf16.mxu0 0
        %1136 = vmatpush1.bf16.msra.mxu0 0
        %1137 = vmatprep.subr.bf16.mxu0 0
        %1138 = vmatpush1.bf16.msra.mxu0 0
        %1139 = vmatprep.subr.bf16.mxu0 0
        %1140 = vmatpush1.bf16.msra.mxu0 0
        %1141 = vmatprep.subr.bf16.mxu0 0
        %1142 = vmatpush1.bf16.msra.mxu0 0
        %1143 = vmatprep.subr.bf16.mxu0 0
        %1144 = vmatpush1.bf16.msra.mxu0 0
        %1145 = vmatprep.subr.bf16.mxu0 0
        %1146 = vmatpush1.bf16.msra.mxu0 0
        %1147 = vmatprep.subr.bf16.mxu0 0
        %1148 = vmatpush1.bf16.msra.mxu0 0
        %1149 = vmatprep.mubr.bf16.mxu0 0
        %1150 = vmatmul.mubr.bf16.gmra.mrb[0].mxu0 %v1115
        %v1151 = vpop.f32.mrb[0].mxu0
        %v1152 = vadd.f32 0.0, %v1151
        %v1153 = vpop.f32.mrb[0].mxu0
        %v1154 = vpop.f32.mrb[0].mxu0
        %v1155 = vpop.f32.mrb[0].mxu0
        %1156 = vdwg.mxu0
        %vm1157 = vcmp.gt.f32.partialorder %v1152, 0.0
        %v1158 = vmul.f32 %v1152, 0.2
        %v1159 = vsel %vm1157, %v1152, %v1158
        %v1160 = vpack.c.bf16 %v1159, %v1159
        %v1162 = vsel %vm425, %v1160, 0
        %1164 = vmatprep.subr.bf16.mxu0 0
        %1165 = vmatpush1.bf16.msra.mxu0 %v1162
        %1166 = vmatprep.subr.bf16.mxu0 0
        %1167 = vmatpush1.bf16.msra.mxu0 0
        %1168 = vmatprep.subr.bf16.mxu0 0
        %1169 = vmatpush1.bf16.msra.mxu0 0
        %1170 = vmatprep.subr.bf16.mxu0 0
        %1171 = vmatpush1.bf16.msra.mxu0 0
        %1172 = vmatprep.subr.bf16.mxu0 0
        %1173 = vmatpush1.bf16.msra.mxu0 0
        %1174 = vmatprep.subr.bf16.mxu0 0
        %1175 = vmatpush1.bf16.msra.mxu0 0
        %1176 = vmatprep.subr.bf16.mxu0 0
        %1177 = vmatpush1.bf16.msra.mxu0 0
        %1178 = vmatprep.subr.bf16.mxu0 0
        %1179 = vmatpush1.bf16.msra.mxu0 0
        %1180 = vmatprep.subr.bf16.mxu0 0
        %1181 = vmatpush1.bf16.msra.mxu0 0
        %1182 = vmatprep.subr.bf16.mxu0 0
        %1183 = vmatpush1.bf16.msra.mxu0 0
        %1184 = vmatprep.subr.bf16.mxu0 0
        %1185 = vmatpush1.bf16.msra.mxu0 0
        %1186 = vmatprep.subr.bf16.mxu0 0
        %1187 = vmatpush1.bf16.msra.mxu0 0
        %1188 = vmatprep.subr.bf16.mxu0 0
        %1189 = vmatpush1.bf16.msra.mxu0 0
        %1190 = vmatprep.subr.bf16.mxu0 0
        %1191 = vmatpush1.bf16.msra.mxu0 0
        %1192 = vmatprep.subr.bf16.mxu0 0
        %1193 = vmatpush1.bf16.msra.mxu0 0
        %1194 = vmatprep.subr.bf16.mxu0 0
        %1195 = vmatpush1.bf16.msra.mxu0 0
        %1196 = vmatprep.mubr.bf16.mxu0 0
        %1197 = vmatmul.mubr.bf16.gmra.mrb[0].mxu0 %v423
        %v1198 = vpop.f32.mrb[0].mxu0
        %v1199 = vadd.f32 %v419, %v1198
        %v1200 = vpop.f32.mrb[0].mxu0
        %v1201 = vpop.f32.mrb[0].mxu0
        %v1202 = vpop.f32.mrb[0].mxu0
        %1203 = vdwg.mxu0
        %vm1204 = vcmp.gt.f32.partialorder %v1199, 0.0
        %v1205 = vmul.f32 %v1199, 0.2
        %v1206 = vsel %vm1204, %v1199, %v1205
        %v1207 = vadd.f32 %v1113, %v1206
        %v1208 = vpack.c.bf16 %v1207, %v1207
        %v1209 = vsel %vm368, %v1207, 0.0
        %1210 = vadd.xlane.f32.xlu0 %v1209
        %v1211 = vpop.xlane.xlu0 %1210
        %v1212 = vmul.f32 %v1211, %v477
        %v1213 = vpack.c.bf16 %v1212, %v1212
        %v1215 = vsel %vm425, %v1213, 0
        %1217 = vmatprep.subr.bf16.mxu0 0
        %1218 = vmatpush1.bf16.msra.mxu0 %v1215
        %1219 = vmatprep.subr.bf16.mxu0 0
        %1220 = vmatpush1.bf16.msra.mxu0 0
        %1221 = vmatprep.subr.bf16.mxu0 0
        %1222 = vmatpush1.bf16.msra.mxu0 0
        %1223 = vmatprep.subr.bf16.mxu0 0
        %1224 = vmatpush1.bf16.msra.mxu0 0
        %1225 = vmatprep.subr.bf16.mxu0 0
        %1226 = vmatpush1.bf16.msra.mxu0 0
        %1227 = vmatprep.subr.bf16.mxu0 0
        %1228 = vmatpush1.bf16.msra.mxu0 0
        %1229 = vmatprep.subr.bf16.mxu0 0
        %1230 = vmatpush1.bf16.msra.mxu0 0
        %1231 = vmatprep.subr.bf16.mxu0 0
        %1232 = vmatpush1.bf16.msra.mxu0 0
        %1233 = vmatprep.subr.bf16.mxu0 0
        %1234 = vmatpush1.bf16.msra.mxu0 0
        %1235 = vmatprep.subr.bf16.mxu0 0
        %1236 = vmatpush1.bf16.msra.mxu0 0
        %1237 = vmatprep.subr.bf16.mxu0 0
        %1238 = vmatpush1.bf16.msra.mxu0 0
        %1239 = vmatprep.subr.bf16.mxu0 0
        %1240 = vmatpush1.bf16.msra.mxu0 0
        %1241 = vmatprep.subr.bf16.mxu0 0
        %1242 = vmatpush1.bf16.msra.mxu0 0
        %1243 = vmatprep.subr.bf16.mxu0 0
        %1244 = vmatpush1.bf16.msra.mxu0 0
        %1245 = vmatprep.subr.bf16.mxu0 0
        %1246 = vmatpush1.bf16.msra.mxu0 0
        %1247 = vmatprep.subr.bf16.mxu0 0
        %1248 = vmatpush1.bf16.msra.mxu0 0
        %1249 = vmatprep.mubr.bf16.mxu0 0
        %1250 = vmatmul.mubr.bf16.gmra.mrb[0].mxu0 %v484
        %v1251 = vpop.f32.mrb[0].mxu0
        %v1252 = vadd.f32 %v481, %v1251
        %v1253 = vpop.f32.mrb[0].mxu0
        %v1254 = vpop.f32.mrb[0].mxu0
        %v1255 = vpop.f32.mrb[0].mxu0
        %1256 = vdwg.mxu0
        %vm1257 = vcmp.gt.f32.partialorder %v1252, 0.0
        %v1258 = vmul.f32 %v1252, 0.2
        %v1259 = vsel %vm1257, %v1252, %v1258
        %v1260 = vpack.c.bf16 %v1259, %v1259
        %v1262 = vsel %vm425, %v1260, 0
        %1264 = vmatprep.subr.bf16.mxu0 0
        %1265 = vmatpush1.bf16.msra.mxu0 %v1262
        %1266 = vmatprep.subr.bf16.mxu0 0
        %1267 = vmatpush1.bf16.msra.mxu0 0
        %1268 = vmatprep.subr.bf16.mxu0 0
        %1269 = vmatpush1.bf16.msra.mxu0 0
        %1270 = vmatprep.subr.bf16.mxu0 0
        %1271 = vmatpush1.bf16.msra.mxu0 0
        %1272 = vmatprep.subr.bf16.mxu0 0
        %1273 = vmatpush1.bf16.msra.mxu0 0
        %1274 = vmatprep.subr.bf16.mxu0 0
        %1275 = vmatpush1.bf16.msra.mxu0 0
        %1276 = vmatprep.subr.bf16.mxu0 0
        %1277 = vmatpush1.bf16.msra.mxu0 0
        %1278 = vmatprep.subr.bf16.mxu0 0
        %1279 = vmatpush1.bf16.msra.mxu0 0
        %1280 = vmatprep.subr.bf16.mxu0 0
        %1281 = vmatpush1.bf16.msra.mxu0 0
        %1282 = vmatprep.subr.bf16.mxu0 0
        %1283 = vmatpush1.bf16.msra.mxu0 0
        %1284 = vmatprep.subr.bf16.mxu0 0
        %1285 = vmatpush1.bf16.msra.mxu0 0
        %1286 = vmatprep.subr.bf16.mxu0 0
        %1287 = vmatpush1.bf16.msra.mxu0 0
        %1288 = vmatprep.subr.bf16.mxu0 0
        %1289 = vmatpush1.bf16.msra.mxu0 0
        %1290 = vmatprep.subr.bf16.mxu0 0
        %1291 = vmatpush1.bf16.msra.mxu0 0
        %1292 = vmatprep.subr.bf16.mxu0 0
        %1293 = vmatpush1.bf16.msra.mxu0 0
        %1294 = vmatprep.subr.bf16.mxu0 0
        %1295 = vmatpush1.bf16.msra.mxu0 0
        %1296 = vmatprep.mubr.bf16.mxu0 0
        %1297 = vmatmul.mubr.bf16.gmra.mrb[0].mxu0 %v539
        %v1298 = vpop.f32.mrb[0].mxu0
        %v1299 = vadd.f32 %v358, %v1298
        %v1300 = vpop.f32.mrb[0].mxu0
        %v1301 = vpop.f32.mrb[0].mxu0
        %v1302 = vadd.f32 %v359, %v1301
        %v1303 = vpop.f32.mrb[0].mxu0
        %1304 = vdwg.mxu0
        %1306 = vset.pattern.permute.xlu0 0
        %1307 = vperm.xlu0 %1306, %v1299
        %v1308 = vpop.permute.xlu0 %1307
        %1311 = vset.pattern.permute.xlu0 0
        %1312 = vperm.xlu0 %1311, %v1302
        %v1313 = vpop.permute.xlu0 %1312
        %v1316 = vsel %vm425, %v1208, 0
        %1318 = vmatprep.subr.bf16.mxu0 0
        %1319 = vmatpush1.bf16.msra.mxu0 %v1316
        %1320 = vmatprep.subr.bf16.mxu0 0
        %1321 = vmatpush1.bf16.msra.mxu0 0
        %1322 = vmatprep.subr.bf16.mxu0 0
        %1323 = vmatpush1.bf16.msra.mxu0 0
        %1324 = vmatprep.subr.bf16.mxu0 0
        %1325 = vmatpush1.bf16.msra.mxu0 0
        %1326 = vmatprep.subr.bf16.mxu0 0
        %1327 = vmatpush1.bf16.msra.mxu0 0
        %1328 = vmatprep.subr.bf16.mxu0 0
        %1329 = vmatpush1.bf16.msra.mxu0 0
        %1330 = vmatprep.subr.bf16.mxu0 0
        %1331 = vmatpush1.bf16.msra.mxu0 0
        %1332 = vmatprep.subr.bf16.mxu0 0
        %1333 = vmatpush1.bf16.msra.mxu0 0
        %1334 = vmatprep.subr.bf16.mxu0 0
        %1335 = vmatpush1.bf16.msra.mxu0 0
        %1336 = vmatprep.subr.bf16.mxu0 0
        %1337 = vmatpush1.bf16.msra.mxu0 0
        %1338 = vmatprep.subr.bf16.mxu0 0
        %1339 = vmatpush1.bf16.msra.mxu0 0
        %1340 = vmatprep.subr.bf16.mxu0 0
        %1341 = vmatpush1.bf16.msra.mxu0 0
        %1342 = vmatprep.subr.bf16.mxu0 0
        %1343 = vmatpush1.bf16.msra.mxu0 0
        %1344 = vmatprep.subr.bf16.mxu0 0
        %1345 = vmatpush1.bf16.msra.mxu0 0
        %1346 = vmatprep.subr.bf16.mxu0 0
        %1347 = vmatpush1.bf16.msra.mxu0 0
        %1348 = vmatprep.subr.bf16.mxu0 0
        %1349 = vmatpush1.bf16.msra.mxu0 0
        %1350 = vmatprep.mubr.bf16.mxu0 0
        %1351 = vmatmul.mubr.bf16.gmra.mrb[0].mxu0 %v601
        %v1352 = vpop.f32.mrb[0].mxu0
        %v1353 = vadd.f32 %v1308, %v1352
        %v1354 = vpop.f32.mrb[0].mxu0
        %v1355 = vpop.f32.mrb[0].mxu0
        %v1356 = vadd.f32 %v1313, %v1355
        %v1357 = vpop.f32.mrb[0].mxu0
        %1358 = vdwg.mxu0
        %v1359 = vsub.f32 0.0, %v1353
        %v1360 = vsub.f32 0.0, %v1356
        %v1361 = vmul.f32 %v1359, 1.442695
        %v1362 = vpow.pop %v1361
        %v1363 = vmul.f32 %v1360, 1.442695
        %v1364 = vpow.pop %v1363
        %v1365 = vadd.f32 %v1362, 1.0
        %v1366 = vadd.f32 %v1364, 1.0
        %v1367 = vrcp.pop %v1365
        %v1368 = vrcp.pop %v1366
        %v1369 = vpack.c.bf16 %v1368, %v1367
        %v1370 = vsel %vm368, %v1208, 0
        %1372 = vmatprep.subr.bf16.mxu0 0
        %1373 = vmatpush1.bf16.msra.mxu0 %v1369
        %1374 = vmatprep.subr.bf16.mxu0 0
        %1375 = vmatpush1.bf16.msra.mxu0 0
        %1376 = vmatprep.subr.bf16.mxu0 0
        %1377 = vmatpush1.bf16.msra.mxu0 0
        %1378 = vmatprep.subr.bf16.mxu0 0
        %1379 = vmatpush1.bf16.msra.mxu0 0
        %1380 = vmatprep.subr.bf16.mxu0 0
        %1381 = vmatpush1.bf16.msra.mxu0 0
        %1382 = vmatprep.subr.bf16.mxu0 0
        %1383 = vmatpush1.bf16.msra.mxu0 0
        %1384 = vmatprep.subr.bf16.mxu0 0
        %1385 = vmatpush1.bf16.msra.mxu0 0
        %1386 = vmatprep.subr.bf16.mxu0 0
        %1387 = vmatpush1.bf16.msra.mxu0 0
        %1388 = vmatprep.subr.bf16.mxu0 0
        %1389 = vmatpush1.bf16.msra.mxu0 0
        %1390 = vmatprep.subr.bf16.mxu0 0
        %1391 = vmatpush1.bf16.msra.mxu0 0
        %1392 = vmatprep.subr.bf16.mxu0 0
        %1393 = vmatpush1.bf16.msra.mxu0 0
        %1394 = vmatprep.subr.bf16.mxu0 0
        %1395 = vmatpush1.bf16.msra.mxu0 0
        %1396 = vmatprep.subr.bf16.mxu0 0
        %1397 = vmatpush1.bf16.msra.mxu0 0
        %1398 = vmatprep.subr.bf16.mxu0 0
        %1399 = vmatpush1.bf16.msra.mxu0 0
        %1400 = vmatprep.subr.bf16.mxu0 0
        %1401 = vmatpush1.bf16.msra.mxu0 0
        %1402 = vmatprep.subr.bf16.mxu0 0
        %1403 = vmatpush1.bf16.msra.mxu0 0
        %1404 = vmatprep.mubr.bf16.mxu0 0
        %1405 = vmatmul.mubr.bf16.gmra.mrb[0].mxu0 %v1370
        %v1406 = vpop.f32.mrb[0].mxu0
        %v1407 = vadd.f32 0.0, %v1406
        %v1408 = vpop.f32.mrb[0].mxu0
        %v1409 = vpop.f32.mrb[0].mxu0
        %v1410 = vpop.f32.mrb[0].mxu0
        %1411 = vdwg.mxu0
        %vm1412 = vcmp.gt.f32.partialorder %v1407, 0.0
        %v1413 = vmul.f32 %v1407, 0.2
        %v1414 = vsel %vm1412, %v1407, %v1413
        %v1415 = vpack.c.bf16 %v1414, %v1414
        %v1417 = vsel %vm425, %v1415, 0
        %1419 = vmatprep.subr.bf16.mxu0 0
        %1420 = vmatpush1.bf16.msra.mxu0 %v1417
        %1421 = vmatprep.subr.bf16.mxu0 0
        %1422 = vmatpush1.bf16.msra.mxu0 0
        %1423 = vmatprep.subr.bf16.mxu0 0
        %1424 = vmatpush1.bf16.msra.mxu0 0
        %1425 = vmatprep.subr.bf16.mxu0 0
        %1426 = vmatpush1.bf16.msra.mxu0 0
        %1427 = vmatprep.subr.bf16.mxu0 0
        %1428 = vmatpush1.bf16.msra.mxu0 0
        %1429 = vmatprep.subr.bf16.mxu0 0
        %1430 = vmatpush1.bf16.msra.mxu0 0
        %1431 = vmatprep.subr.bf16.mxu0 0
        %1432 = vmatpush1.bf16.msra.mxu0 0
        %1433 = vmatprep.subr.bf16.mxu0 0
        %1434 = vmatpush1.bf16.msra.mxu0 0
        %1435 = vmatprep.subr.bf16.mxu0 0
        %1436 = vmatpush1.bf16.msra.mxu0 0
        %1437 = vmatprep.subr.bf16.mxu0 0
        %1438 = vmatpush1.bf16.msra.mxu0 0
        %1439 = vmatprep.subr.bf16.mxu0 0
        %1440 = vmatpush1.bf16.msra.mxu0 0
        %1441 = vmatprep.subr.bf16.mxu0 0
        %1442 = vmatpush1.bf16.msra.mxu0 0
        %1443 = vmatprep.subr.bf16.mxu0 0
        %1444 = vmatpush1.bf16.msra.mxu0 0
        %1445 = vmatprep.subr.bf16.mxu0 0
        %1446 = vmatpush1.bf16.msra.mxu0 0
        %1447 = vmatprep.subr.bf16.mxu0 0
        %1448 = vmatpush1.bf16.msra.mxu0 0
        %1449 = vmatprep.subr.bf16.mxu0 0
        %1450 = vmatpush1.bf16.msra.mxu0 0
        %1451 = vmatprep.mubr.bf16.mxu0 0
        %1452 = vmatmul.mubr.bf16.gmra.mrb[0].mxu0 %v709
        %v1453 = vpop.f32.mrb[0].mxu0
        %v1454 = vadd.f32 %v706, %v1453
        %v1455 = vpop.f32.mrb[0].mxu0
        %v1456 = vpop.f32.mrb[0].mxu0
        %v1457 = vpop.f32.mrb[0].mxu0
        %1458 = vdwg.mxu0
        %vm1459 = vcmp.gt.f32.partialorder %v1454, 0.0
        %v1460 = vmul.f32 %v1454, 0.2
        %v1461 = vsel %vm1459, %v1454, %v1460
        %s1462 = scalar_lea.vmem %s339, 16 [#allocation5]
        %1463 = vst.msk [vmem:[%s1462] sm:$0xff] %vm368, %v1461
        %s1464 = scalar_lea.vmem %s344, 12
        %v1465 = vld [vmem:[%s1464] sm:$0xf]
        %v1466 = vunpack.c.l.bf16 %v1465
        %v1468 = vsel %vm368, %v1465, 0
        %1470 = vmatprep.subr.bf16.mxu0 0
        %1471 = vmatpush1.bf16.msra.mxu0 %v366
        %1472 = vmatprep.subr.bf16.mxu0 0
        %1473 = vmatpush1.bf16.msra.mxu0 0
        %1474 = vmatprep.subr.bf16.mxu0 0
        %1475 = vmatpush1.bf16.msra.mxu0 0
        %1476 = vmatprep.subr.bf16.mxu0 0
        %1477 = vmatpush1.bf16.msra.mxu0 0
        %1478 = vmatprep.subr.bf16.mxu0 0
        %1479 = vmatpush1.bf16.msra.mxu0 0
        %1480 = vmatprep.subr.bf16.mxu0 0
        %1481 = vmatpush1.bf16.msra.mxu0 0
        %1482 = vmatprep.subr.bf16.mxu0 0
        %1483 = vmatpush1.bf16.msra.mxu0 0
        %1484 = vmatprep.subr.bf16.mxu0 0
        %1485 = vmatpush1.bf16.msra.mxu0 0
        %1486 = vmatprep.subr.bf16.mxu0 0
        %1487 = vmatpush1.bf16.msra.mxu0 0
        %1488 = vmatprep.subr.bf16.mxu0 0
        %1489 = vmatpush1.bf16.msra.mxu0 0
        %1490 = vmatprep.subr.bf16.mxu0 0
        %1491 = vmatpush1.bf16.msra.mxu0 0
        %1492 = vmatprep.subr.bf16.mxu0 0
        %1493 = vmatpush1.bf16.msra.mxu0 0
        %1494 = vmatprep.subr.bf16.mxu0 0
        %1495 = vmatpush1.bf16.msra.mxu0 0
        %1496 = vmatprep.subr.bf16.mxu0 0
        %1497 = vmatpush1.bf16.msra.mxu0 0
        %1498 = vmatprep.subr.bf16.mxu0 0
        %1499 = vmatpush1.bf16.msra.mxu0 0
        %1500 = vmatprep.subr.bf16.mxu0 0
        %1501 = vmatpush1.bf16.msra.mxu0 0
        %1502 = vmatprep.mubr.bf16.mxu0 0
        %1503 = vmatmul.mubr.bf16.gmra.mrb[0].mxu0 %v1468
        %v1504 = vpop.f32.mrb[0].mxu0
        %v1505 = vadd.f32 0.0, %v1504
        %v1506 = vpop.f32.mrb[0].mxu0
        %v1507 = vpop.f32.mrb[0].mxu0
        %v1508 = vpop.f32.mrb[0].mxu0
        %1509 = vdwg.mxu0
        %vm1510 = vcmp.gt.f32.partialorder %v1505, 0.0
        %v1511 = vmul.f32 %v1505, 0.2
        %v1512 = vsel %vm1510, %v1505, %v1511
        %v1513 = vpack.c.bf16 %v1512, %v1512
        %v1515 = vsel %vm425, %v1513, 0
        %1517 = vmatprep.subr.bf16.mxu0 0
        %1518 = vmatpush1.bf16.msra.mxu0 %v1515
        %1519 = vmatprep.subr.bf16.mxu0 0
        %1520 = vmatpush1.bf16.msra.mxu0 0
        %1521 = vmatprep.subr.bf16.mxu0 0
        %1522 = vmatpush1.bf16.msra.mxu0 0
        %1523 = vmatprep.subr.bf16.mxu0 0
        %1524 = vmatpush1.bf16.msra.mxu0 0
        %1525 = vmatprep.subr.bf16.mxu0 0
        %1526 = vmatpush1.bf16.msra.mxu0 0
        %1527 = vmatprep.subr.bf16.mxu0 0
        %1528 = vmatpush1.bf16.msra.mxu0 0
        %1529 = vmatprep.subr.bf16.mxu0 0
        %1530 = vmatpush1.bf16.msra.mxu0 0
        %1531 = vmatprep.subr.bf16.mxu0 0
        %1532 = vmatpush1.bf16.msra.mxu0 0
        %1533 = vmatprep.subr.bf16.mxu0 0
        %1534 = vmatpush1.bf16.msra.mxu0 0
        %1535 = vmatprep.subr.bf16.mxu0 0
        %1536 = vmatpush1.bf16.msra.mxu0 0
        %1537 = vmatprep.subr.bf16.mxu0 0
        %1538 = vmatpush1.bf16.msra.mxu0 0
        %1539 = vmatprep.subr.bf16.mxu0 0
        %1540 = vmatpush1.bf16.msra.mxu0 0
        %1541 = vmatprep.subr.bf16.mxu0 0
        %1542 = vmatpush1.bf16.msra.mxu0 0
        %1543 = vmatprep.subr.bf16.mxu0 0
        %1544 = vmatpush1.bf16.msra.mxu0 0
        %1545 = vmatprep.subr.bf16.mxu0 0
        %1546 = vmatpush1.bf16.msra.mxu0 0
        %1547 = vmatprep.subr.bf16.mxu0 0
        %1548 = vmatpush1.bf16.msra.mxu0 0
        %1549 = vmatprep.mubr.bf16.mxu0 0
        %1550 = vmatmul.mubr.bf16.gmra.mrb[0].mxu0 %v423
        %v1551 = vpop.f32.mrb[0].mxu0
        %v1552 = vadd.f32 %v419, %v1551
        %v1553 = vpop.f32.mrb[0].mxu0
        %v1554 = vpop.f32.mrb[0].mxu0
        %v1555 = vpop.f32.mrb[0].mxu0
        %1556 = vdwg.mxu0
        %vm1557 = vcmp.gt.f32.partialorder %v1552, 0.0
        %v1558 = vmul.f32 %v1552, 0.2
        %v1559 = vsel %vm1557, %v1552, %v1558
        %v1560 = vadd.f32 %v1466, %v1559
        %v1561 = vpack.c.bf16 %v1560, %v1560
        %v1562 = vsel %vm368, %v1560, 0.0
        %1563 = vadd.xlane.f32.xlu0 %v1562
        %v1564 = vpop.xlane.xlu0 %1563
        %v1565 = vmul.f32 %v1564, %v477
        %v1566 = vpack.c.bf16 %v1565, %v1565
        %v1568 = vsel %vm425, %v1566, 0
        %1570 = vmatprep.subr.bf16.mxu0 0
        %1571 = vmatpush1.bf16.msra.mxu0 %v1568
        %1572 = vmatprep.subr.bf16.mxu0 0
        %1573 = vmatpush1.bf16.msra.mxu0 0
        %1574 = vmatprep.subr.bf16.mxu0 0
        %1575 = vmatpush1.bf16.msra.mxu0 0
        %1576 = vmatprep.subr.bf16.mxu0 0
        %1577 = vmatpush1.bf16.msra.mxu0 0
        %1578 = vmatprep.subr.bf16.mxu0 0
        %1579 = vmatpush1.bf16.msra.mxu0 0
        %1580 = vmatprep.subr.bf16.mxu0 0
        %1581 = vmatpush1.bf16.msra.mxu0 0
        %1582 = vmatprep.subr.bf16.mxu0 0
        %1583 = vmatpush1.bf16.msra.mxu0 0
        %1584 = vmatprep.subr.bf16.mxu0 0
        %1585 = vmatpush1.bf16.msra.mxu0 0
        %1586 = vmatprep.subr.bf16.mxu0 0
        %1587 = vmatpush1.bf16.msra.mxu0 0
        %1588 = vmatprep.subr.bf16.mxu0 0
        %1589 = vmatpush1.bf16.msra.mxu0 0
        %1590 = vmatprep.subr.bf16.mxu0 0
        %1591 = vmatpush1.bf16.msra.mxu0 0
        %1592 = vmatprep.subr.bf16.mxu0 0
        %1593 = vmatpush1.bf16.msra.mxu0 0
        %1594 = vmatprep.subr.bf16.mxu0 0
        %1595 = vmatpush1.bf16.msra.mxu0 0
        %1596 = vmatprep.subr.bf16.mxu0 0
        %1597 = vmatpush1.bf16.msra.mxu0 0
        %1598 = vmatprep.subr.bf16.mxu0 0
        %1599 = vmatpush1.bf16.msra.mxu0 0
        %1600 = vmatprep.subr.bf16.mxu0 0
        %1601 = vmatpush1.bf16.msra.mxu0 0
        %1602 = vmatprep.mubr.bf16.mxu0 0
        %1603 = vmatmul.mubr.bf16.gmra.mrb[0].mxu0 %v484
        %v1604 = vpop.f32.mrb[0].mxu0
        %v1605 = vadd.f32 %v481, %v1604
        %v1606 = vpop.f32.mrb[0].mxu0
        %v1607 = vpop.f32.mrb[0].mxu0
        %v1608 = vpop.f32.mrb[0].mxu0
        %1609 = vdwg.mxu0
        %vm1610 = vcmp.gt.f32.partialorder %v1605, 0.0
        %v1611 = vmul.f32 %v1605, 0.2
        %v1612 = vsel %vm1610, %v1605, %v1611
        %v1613 = vpack.c.bf16 %v1612, %v1612
        %v1615 = vsel %vm425, %v1613, 0
        %1617 = vmatprep.subr.bf16.mxu0 0
        %1618 = vmatpush1.bf16.msra.mxu0 %v1615
        %1619 = vmatprep.subr.bf16.mxu0 0
        %1620 = vmatpush1.bf16.msra.mxu0 0
        %1621 = vmatprep.subr.bf16.mxu0 0
        %1622 = vmatpush1.bf16.msra.mxu0 0
        %1623 = vmatprep.subr.bf16.mxu0 0
        %1624 = vmatpush1.bf16.msra.mxu0 0
        %1625 = vmatprep.subr.bf16.mxu0 0
        %1626 = vmatpush1.bf16.msra.mxu0 0
        %1627 = vmatprep.subr.bf16.mxu0 0
        %1628 = vmatpush1.bf16.msra.mxu0 0
        %1629 = vmatprep.subr.bf16.mxu0 0
        %1630 = vmatpush1.bf16.msra.mxu0 0
        %1631 = vmatprep.subr.bf16.mxu0 0
        %1632 = vmatpush1.bf16.msra.mxu0 0
        %1633 = vmatprep.subr.bf16.mxu0 0
        %1634 = vmatpush1.bf16.msra.mxu0 0
        %1635 = vmatprep.subr.bf16.mxu0 0
        %1636 = vmatpush1.bf16.msra.mxu0 0
        %1637 = vmatprep.subr.bf16.mxu0 0
        %1638 = vmatpush1.bf16.msra.mxu0 0
        %1639 = vmatprep.subr.bf16.mxu0 0
        %1640 = vmatpush1.bf16.msra.mxu0 0
        %1641 = vmatprep.subr.bf16.mxu0 0
        %1642 = vmatpush1.bf16.msra.mxu0 0
        %1643 = vmatprep.subr.bf16.mxu0 0
        %1644 = vmatpush1.bf16.msra.mxu0 0
        %1645 = vmatprep.subr.bf16.mxu0 0
        %1646 = vmatpush1.bf16.msra.mxu0 0
        %1647 = vmatprep.subr.bf16.mxu0 0
        %1648 = vmatpush1.bf16.msra.mxu0 0
        %1649 = vmatprep.mubr.bf16.mxu0 0
        %1650 = vmatmul.mubr.bf16.gmra.mrb[0].mxu0 %v539
        %v1651 = vpop.f32.mrb[0].mxu0
        %v1652 = vadd.f32 %v358, %v1651
        %v1653 = vpop.f32.mrb[0].mxu0
        %v1654 = vpop.f32.mrb[0].mxu0
        %v1655 = vadd.f32 %v359, %v1654
        %v1656 = vpop.f32.mrb[0].mxu0
        %1657 = vdwg.mxu0
        %1659 = vset.pattern.permute.xlu0 0
        %1660 = vperm.xlu0 %1659, %v1652
        %v1661 = vpop.permute.xlu0 %1660
        %1664 = vset.pattern.permute.xlu0 0
        %1665 = vperm.xlu0 %1664, %v1655
        %v1666 = vpop.permute.xlu0 %1665
        %v1669 = vsel %vm425, %v1561, 0
        %1671 = vmatprep.subr.bf16.mxu0 0
        %1672 = vmatpush1.bf16.msra.mxu0 %v1669
        %1673 = vmatprep.subr.bf16.mxu0 0
        %1674 = vmatpush1.bf16.msra.mxu0 0
        %1675 = vmatprep.subr.bf16.mxu0 0
        %1676 = vmatpush1.bf16.msra.mxu0 0
        %1677 = vmatprep.subr.bf16.mxu0 0
        %1678 = vmatpush1.bf16.msra.mxu0 0
        %1679 = vmatprep.subr.bf16.mxu0 0
        %1680 = vmatpush1.bf16.msra.mxu0 0
        %1681 = vmatprep.subr.bf16.mxu0 0
        %1682 = vmatpush1.bf16.msra.mxu0 0
        %1683 = vmatprep.subr.bf16.mxu0 0
        %1684 = vmatpush1.bf16.msra.mxu0 0
        %1685 = vmatprep.subr.bf16.mxu0 0
        %1686 = vmatpush1.bf16.msra.mxu0 0
        %1687 = vmatprep.subr.bf16.mxu0 0
        %1688 = vmatpush1.bf16.msra.mxu0 0
        %1689 = vmatprep.subr.bf16.mxu0 0
        %1690 = vmatpush1.bf16.msra.mxu0 0
        %1691 = vmatprep.subr.bf16.mxu0 0
        %1692 = vmatpush1.bf16.msra.mxu0 0
        %1693 = vmatprep.subr.bf16.mxu0 0
        %1694 = vmatpush1.bf16.msra.mxu0 0
        %1695 = vmatprep.subr.bf16.mxu0 0
        %1696 = vmatpush1.bf16.msra.mxu0 0
        %1697 = vmatprep.subr.bf16.mxu0 0
        %1698 = vmatpush1.bf16.msra.mxu0 0
        %1699 = vmatprep.subr.bf16.mxu0 0
        %1700 = vmatpush1.bf16.msra.mxu0 0
        %1701 = vmatprep.subr.bf16.mxu0 0
        %1702 = vmatpush1.bf16.msra.mxu0 0
        %1703 = vmatprep.mubr.bf16.mxu0 0
        %1704 = vmatmul.mubr.bf16.gmra.mrb[0].mxu0 %v601
        %v1705 = vpop.f32.mrb[0].mxu0
        %v1706 = vadd.f32 %v1661, %v1705
        %v1707 = vpop.f32.mrb[0].mxu0
        %v1708 = vpop.f32.mrb[0].mxu0
        %v1709 = vadd.f32 %v1666, %v1708
        %v1710 = vpop.f32.mrb[0].mxu0
        %1711 = vdwg.mxu0
        %v1712 = vsub.f32 0.0, %v1706
        %v1713 = vsub.f32 0.0, %v1709
        %v1714 = vmul.f32 %v1712, 1.442695
        %v1715 = vpow.pop %v1714
        %v1716 = vmul.f32 %v1713, 1.442695
        %v1717 = vpow.pop %v1716
        %v1718 = vadd.f32 %v1715, 1.0
        %v1719 = vadd.f32 %v1717, 1.0
        %v1720 = vrcp.pop %v1718
        %v1721 = vrcp.pop %v1719
        %v1722 = vpack.c.bf16 %v1721, %v1720
        %v1723 = vsel %vm368, %v1561, 0
        %1725 = vmatprep.subr.bf16.mxu0 0
        %1726 = vmatpush1.bf16.msra.mxu0 %v1722
        %1727 = vmatprep.subr.bf16.mxu0 0
        %1728 = vmatpush1.bf16.msra.mxu0 0
        %1729 = vmatprep.subr.bf16.mxu0 0
        %1730 = vmatpush1.bf16.msra.mxu0 0
        %1731 = vmatprep.subr.bf16.mxu0 0
        %1732 = vmatpush1.bf16.msra.mxu0 0
        %1733 = vmatprep.subr.bf16.mxu0 0
        %1734 = vmatpush1.bf16.msra.mxu0 0
        %1735 = vmatprep.subr.bf16.mxu0 0
        %1736 = vmatpush1.bf16.msra.mxu0 0
        %1737 = vmatprep.subr.bf16.mxu0 0
        %1738 = vmatpush1.bf16.msra.mxu0 0
        %1739 = vmatprep.subr.bf16.mxu0 0
        %1740 = vmatpush1.bf16.msra.mxu0 0
        %1741 = vmatprep.subr.bf16.mxu0 0
        %1742 = vmatpush1.bf16.msra.mxu0 0
        %1743 = vmatprep.subr.bf16.mxu0 0
        %1744 = vmatpush1.bf16.msra.mxu0 0
        %1745 = vmatprep.subr.bf16.mxu0 0
        %1746 = vmatpush1.bf16.msra.mxu0 0
        %1747 = vmatprep.subr.bf16.mxu0 0
        %1748 = vmatpush1.bf16.msra.mxu0 0
        %1749 = vmatprep.subr.bf16.mxu0 0
        %1750 = vmatpush1.bf16.msra.mxu0 0
        %1751 = vmatprep.subr.bf16.mxu0 0
        %1752 = vmatpush1.bf16.msra.mxu0 0
        %1753 = vmatprep.subr.bf16.mxu0 0
        %1754 = vmatpush1.bf16.msra.mxu0 0
        %1755 = vmatprep.subr.bf16.mxu0 0
        %1756 = vmatpush1.bf16.msra.mxu0 0
        %1757 = vmatprep.mubr.bf16.mxu0 0
        %1758 = vmatmul.mubr.bf16.gmra.mrb[0].mxu0 %v1723
        %v1759 = vpop.f32.mrb[0].mxu0
        %v1760 = vadd.f32 0.0, %v1759
        %v1761 = vpop.f32.mrb[0].mxu0
        %v1762 = vpop.f32.mrb[0].mxu0
        %v1763 = vpop.f32.mrb[0].mxu0
        %1764 = vdwg.mxu0
        %vm1765 = vcmp.gt.f32.partialorder %v1760, 0.0
        %v1766 = vmul.f32 %v1760, 0.2
        %v1767 = vsel %vm1765, %v1760, %v1766
        %v1768 = vpack.c.bf16 %v1767, %v1767
        %v1770 = vsel %vm425, %v1768, 0
        %1772 = vmatprep.subr.bf16.mxu0 0
        %1773 = vmatpush1.bf16.msra.mxu0 %v1770
        %1774 = vmatprep.subr.bf16.mxu0 0
        %1775 = vmatpush1.bf16.msra.mxu0 0
        %1776 = vmatprep.subr.bf16.mxu0 0
        %1777 = vmatpush1.bf16.msra.mxu0 0
        %1778 = vmatprep.subr.bf16.mxu0 0
        %1779 = vmatpush1.bf16.msra.mxu0 0
        %1780 = vmatprep.subr.bf16.mxu0 0
        %1781 = vmatpush1.bf16.msra.mxu0 0
        %1782 = vmatprep.subr.bf16.mxu0 0
        %1783 = vmatpush1.bf16.msra.mxu0 0
        %1784 = vmatprep.subr.bf16.mxu0 0
        %1785 = vmatpush1.bf16.msra.mxu0 0
        %1786 = vmatprep.subr.bf16.mxu0 0
        %1787 = vmatpush1.bf16.msra.mxu0 0
        %1788 = vmatprep.subr.bf16.mxu0 0
        %1789 = vmatpush1.bf16.msra.mxu0 0
        %1790 = vmatprep.subr.bf16.mxu0 0
        %1791 = vmatpush1.bf16.msra.mxu0 0
        %1792 = vmatprep.subr.bf16.mxu0 0
        %1793 = vmatpush1.bf16.msra.mxu0 0
        %1794 = vmatprep.subr.bf16.mxu0 0
        %1795 = vmatpush1.bf16.msra.mxu0 0
        %1796 = vmatprep.subr.bf16.mxu0 0
        %1797 = vmatpush1.bf16.msra.mxu0 0
        %1798 = vmatprep.subr.bf16.mxu0 0
        %1799 = vmatpush1.bf16.msra.mxu0 0
        %1800 = vmatprep.subr.bf16.mxu0 0
        %1801 = vmatpush1.bf16.msra.mxu0 0
        %1802 = vmatprep.subr.bf16.mxu0 0
        %1803 = vmatpush1.bf16.msra.mxu0 0
        %1804 = vmatprep.mubr.bf16.mxu0 0
        %1805 = vmatmul.mubr.bf16.gmra.mrb[0].mxu0 %v709
        %v1806 = vpop.f32.mrb[0].mxu0
        %v1807 = vadd.f32 %v706, %v1806
        %v1808 = vpop.f32.mrb[0].mxu0
        %v1809 = vpop.f32.mrb[0].mxu0
        %v1810 = vpop.f32.mrb[0].mxu0
        %1811 = vdwg.mxu0
        %vm1812 = vcmp.gt.f32.partialorder %v1807, 0.0
        %v1813 = vmul.f32 %v1807, 0.2
        %v1814 = vsel %vm1812, %v1807, %v1813
        %s1815 = scalar_lea.vmem %s339, 24 [#allocation5]
        %1816 = vst.msk [vmem:[%s1815] sm:$0xff] %vm368, %v1814
        %s1817 = scalar_lea.vmem %s344, 16
        %v1818 = vld [vmem:[%s1817] sm:$0xf]
        %v1819 = vunpack.c.l.bf16 %v1818
        %v1821 = vsel %vm368, %v1818, 0
        %1823 = vmatprep.subr.bf16.mxu0 0
        %1824 = vmatpush1.bf16.msra.mxu0 %v366
        %1825 = vmatprep.subr.bf16.mxu0 0
        %1826 = vmatpush1.bf16.msra.mxu0 0
        %1827 = vmatprep.subr.bf16.mxu0 0
        %1828 = vmatpush1.bf16.msra.mxu0 0
        %1829 = vmatprep.subr.bf16.mxu0 0
        %1830 = vmatpush1.bf16.msra.mxu0 0
        %1831 = vmatprep.subr.bf16.mxu0 0
        %1832 = vmatpush1.bf16.msra.mxu0 0
        %1833 = vmatprep.subr.bf16.mxu0 0
        %1834 = vmatpush1.bf16.msra.mxu0 0
        %1835 = vmatprep.subr.bf16.mxu0 0
        %1836 = vmatpush1.bf16.msra.mxu0 0
        %1837 = vmatprep.subr.bf16.mxu0 0
        %1838 = vmatpush1.bf16.msra.mxu0 0
        %1839 = vmatprep.subr.bf16.mxu0 0
        %1840 = vmatpush1.bf16.msra.mxu0 0
        %1841 = vmatprep.subr.bf16.mxu0 0
        %1842 = vmatpush1.bf16.msra.mxu0 0
        %1843 = vmatprep.subr.bf16.mxu0 0
        %1844 = vmatpush1.bf16.msra.mxu0 0
        %1845 = vmatprep.subr.bf16.mxu0 0
        %1846 = vmatpush1.bf16.msra.mxu0 0
        %1847 = vmatprep.subr.bf16.mxu0 0
        %1848 = vmatpush1.bf16.msra.mxu0 0
        %1849 = vmatprep.subr.bf16.mxu0 0
        %1850 = vmatpush1.bf16.msra.mxu0 0
        %1851 = vmatprep.subr.bf16.mxu0 0
        %1852 = vmatpush1.bf16.msra.mxu0 0
        %1853 = vmatprep.subr.bf16.mxu0 0
        %1854 = vmatpush1.bf16.msra.mxu0 0
        %1855 = vmatprep.mubr.bf16.mxu0 0
        %1856 = vmatmul.mubr.bf16.gmra.mrb[0].mxu0 %v1821
        %v1857 = vpop.f32.mrb[0].mxu0
        %v1858 = vadd.f32 0.0, %v1857
        %v1859 = vpop.f32.mrb[0].mxu0
        %v1860 = vpop.f32.mrb[0].mxu0
        %v1861 = vpop.f32.mrb[0].mxu0
        %1862 = vdwg.mxu0
        %vm1863 = vcmp.gt.f32.partialorder %v1858, 0.0
        %v1864 = vmul.f32 %v1858, 0.2
        %v1865 = vsel %vm1863, %v1858, %v1864
        %v1866 = vpack.c.bf16 %v1865, %v1865
        %v1868 = vsel %vm425, %v1866, 0
        %1870 = vmatprep.subr.bf16.mxu0 0
        %1871 = vmatpush1.bf16.msra.mxu0 %v1868
        %1872 = vmatprep.subr.bf16.mxu0 0
        %1873 = vmatpush1.bf16.msra.mxu0 0
        %1874 = vmatprep.subr.bf16.mxu0 0
        %1875 = vmatpush1.bf16.msra.mxu0 0
        %1876 = vmatprep.subr.bf16.mxu0 0
        %1877 = vmatpush1.bf16.msra.mxu0 0
        %1878 = vmatprep.subr.bf16.mxu0 0
        %1879 = vmatpush1.bf16.msra.mxu0 0
        %1880 = vmatprep.subr.bf16.mxu0 0
        %1881 = vmatpush1.bf16.msra.mxu0 0
        %1882 = vmatprep.subr.bf16.mxu0 0
        %1883 = vmatpush1.bf16.msra.mxu0 0
        %1884 = vmatprep.subr.bf16.mxu0 0
        %1885 = vmatpush1.bf16.msra.mxu0 0
        %1886 = vmatprep.subr.bf16.mxu0 0
        %1887 = vmatpush1.bf16.msra.mxu0 0
        %1888 = vmatprep.subr.bf16.mxu0 0
        %1889 = vmatpush1.bf16.msra.mxu0 0
        %1890 = vmatprep.subr.bf16.mxu0 0
        %1891 = vmatpush1.bf16.msra.mxu0 0
        %1892 = vmatprep.subr.bf16.mxu0 0
        %1893 = vmatpush1.bf16.msra.mxu0 0
        %1894 = vmatprep.subr.bf16.mxu0 0
        %1895 = vmatpush1.bf16.msra.mxu0 0
        %1896 = vmatprep.subr.bf16.mxu0 0
        %1897 = vmatpush1.bf16.msra.mxu0 0
        %1898 = vmatprep.subr.bf16.mxu0 0
        %1899 = vmatpush1.bf16.msra.mxu0 0
        %1900 = vmatprep.subr.bf16.mxu0 0
        %1901 = vmatpush1.bf16.msra.mxu0 0
        %1902 = vmatprep.mubr.bf16.mxu0 0
        %1903 = vmatmul.mubr.bf16.gmra.mrb[0].mxu0 %v423
        %v1904 = vpop.f32.mrb[0].mxu0
        %v1905 = vadd.f32 %v419, %v1904
        %v1906 = vpop.f32.mrb[0].mxu0
        %v1907 = vpop.f32.mrb[0].mxu0
        %v1908 = vpop.f32.mrb[0].mxu0
        %1909 = vdwg.mxu0
        %vm1910 = vcmp.gt.f32.partialorder %v1905, 0.0
        %v1911 = vmul.f32 %v1905, 0.2
        %v1912 = vsel %vm1910, %v1905, %v1911
        %v1913 = vadd.f32 %v1819, %v1912
        %v1914 = vpack.c.bf16 %v1913, %v1913
        %v1915 = vsel %vm368, %v1913, 0.0
        %1916 = vadd.xlane.f32.xlu0 %v1915
        %v1917 = vpop.xlane.xlu0 %1916
        %v1918 = vmul.f32 %v1917, %v477
        %v1919 = vpack.c.bf16 %v1918, %v1918
        %v1921 = vsel %vm425, %v1919, 0
        %1923 = vmatprep.subr.bf16.mxu0 0
        %1924 = vmatpush1.bf16.msra.mxu0 %v1921
        %1925 = vmatprep.subr.bf16.mxu0 0
        %1926 = vmatpush1.bf16.msra.mxu0 0
        %1927 = vmatprep.subr.bf16.mxu0 0
        %1928 = vmatpush1.bf16.msra.mxu0 0
        %1929 = vmatprep.subr.bf16.mxu0 0
        %1930 = vmatpush1.bf16.msra.mxu0 0
        %1931 = vmatprep.subr.bf16.mxu0 0
        %1932 = vmatpush1.bf16.msra.mxu0 0
        %1933 = vmatprep.subr.bf16.mxu0 0
        %1934 = vmatpush1.bf16.msra.mxu0 0
        %1935 = vmatprep.subr.bf16.mxu0 0
        %1936 = vmatpush1.bf16.msra.mxu0 0
        %1937 = vmatprep.subr.bf16.mxu0 0
        %1938 = vmatpush1.bf16.msra.mxu0 0
        %1939 = vmatprep.subr.bf16.mxu0 0
        %1940 = vmatpush1.bf16.msra.mxu0 0
        %1941 = vmatprep.subr.bf16.mxu0 0
        %1942 = vmatpush1.bf16.msra.mxu0 0
        %1943 = vmatprep.subr.bf16.mxu0 0
        %1944 = vmatpush1.bf16.msra.mxu0 0
        %1945 = vmatprep.subr.bf16.mxu0 0
        %1946 = vmatpush1.bf16.msra.mxu0 0
        %1947 = vmatprep.subr.bf16.mxu0 0
        %1948 = vmatpush1.bf16.msra.mxu0 0
        %1949 = vmatprep.subr.bf16.mxu0 0
        %1950 = vmatpush1.bf16.msra.mxu0 0
        %1951 = vmatprep.subr.bf16.mxu0 0
        %1952 = vmatpush1.bf16.msra.mxu0 0
        %1953 = vmatprep.subr.bf16.mxu0 0
        %1954 = vmatpush1.bf16.msra.mxu0 0
        %1955 = vmatprep.mubr.bf16.mxu0 0
        %1956 = vmatmul.mubr.bf16.gmra.mrb[0].mxu0 %v484
        %v1957 = vpop.f32.mrb[0].mxu0
        %v1958 = vadd.f32 %v481, %v1957
        %v1959 = vpop.f32.mrb[0].mxu0
        %v1960 = vpop.f32.mrb[0].mxu0
        %v1961 = vpop.f32.mrb[0].mxu0
        %1962 = vdwg.mxu0
        %vm1963 = vcmp.gt.f32.partialorder %v1958, 0.0
        %v1964 = vmul.f32 %v1958, 0.2
        %v1965 = vsel %vm1963, %v1958, %v1964
        %v1966 = vpack.c.bf16 %v1965, %v1965
        %v1968 = vsel %vm425, %v1966, 0
        %1970 = vmatprep.subr.bf16.mxu0 0
        %1971 = vmatpush1.bf16.msra.mxu0 %v1968
        %1972 = vmatprep.subr.bf16.mxu0 0
        %1973 = vmatpush1.bf16.msra.mxu0 0
        %1974 = vmatprep.subr.bf16.mxu0 0
        %1975 = vmatpush1.bf16.msra.mxu0 0
        %1976 = vmatprep.subr.bf16.mxu0 0
        %1977 = vmatpush1.bf16.msra.mxu0 0
        %1978 = vmatprep.subr.bf16.mxu0 0
        %1979 = vmatpush1.bf16.msra.mxu0 0
        %1980 = vmatprep.subr.bf16.mxu0 0
        %1981 = vmatpush1.bf16.msra.mxu0 0
        %1982 = vmatprep.subr.bf16.mxu0 0
        %1983 = vmatpush1.bf16.msra.mxu0 0
        %1984 = vmatprep.subr.bf16.mxu0 0
        %1985 = vmatpush1.bf16.msra.mxu0 0
        %1986 = vmatprep.subr.bf16.mxu0 0
        %1987 = vmatpush1.bf16.msra.mxu0 0
        %1988 = vmatprep.subr.bf16.mxu0 0
        %1989 = vmatpush1.bf16.msra.mxu0 0
        %1990 = vmatprep.subr.bf16.mxu0 0
        %1991 = vmatpush1.bf16.msra.mxu0 0
        %1992 = vmatprep.subr.bf16.mxu0 0
        %1993 = vmatpush1.bf16.msra.mxu0 0
        %1994 = vmatprep.subr.bf16.mxu0 0
        %1995 = vmatpush1.bf16.msra.mxu0 0
        %1996 = vmatprep.subr.bf16.mxu0 0
        %1997 = vmatpush1.bf16.msra.mxu0 0
        %1998 = vmatprep.subr.bf16.mxu0 0
        %1999 = vmatpush1.bf16.msra.mxu0 0
        %2000 = vmatprep.subr.bf16.mxu0 0
        %2001 = vmatpush1.bf16.msra.mxu0 0
        %2002 = vmatprep.mubr.bf16.mxu0 0
        %2003 = vmatmul.mubr.bf16.gmra.mrb[0].mxu0 %v539
        %v2004 = vpop.f32.mrb[0].mxu0
        %v2005 = vadd.f32 %v358, %v2004
        %v2006 = vpop.f32.mrb[0].mxu0
        %v2007 = vpop.f32.mrb[0].mxu0
        %v2008 = vadd.f32 %v359, %v2007
        %v2009 = vpop.f32.mrb[0].mxu0
        %2010 = vdwg.mxu0
        %2012 = vset.pattern.permute.xlu0 0
        %2013 = vperm.xlu0 %2012, %v2005
        %v2014 = vpop.permute.xlu0 %2013
        %2017 = vset.pattern.permute.xlu0 0
        %2018 = vperm.xlu0 %2017, %v2008
        %v2019 = vpop.permute.xlu0 %2018
        %v2022 = vsel %vm425, %v1914, 0
        %2024 = vmatprep.subr.bf16.mxu0 0
        %2025 = vmatpush1.bf16.msra.mxu0 %v2022
        %2026 = vmatprep.subr.bf16.mxu0 0
        %2027 = vmatpush1.bf16.msra.mxu0 0
        %2028 = vmatprep.subr.bf16.mxu0 0
        %2029 = vmatpush1.bf16.msra.mxu0 0
        %2030 = vmatprep.subr.bf16.mxu0 0
        %2031 = vmatpush1.bf16.msra.mxu0 0
        %2032 = vmatprep.subr.bf16.mxu0 0
        %2033 = vmatpush1.bf16.msra.mxu0 0
        %2034 = vmatprep.subr.bf16.mxu0 0
        %2035 = vmatpush1.bf16.msra.mxu0 0
        %2036 = vmatprep.subr.bf16.mxu0 0
        %2037 = vmatpush1.bf16.msra.mxu0 0
        %2038 = vmatprep.subr.bf16.mxu0 0
        %2039 = vmatpush1.bf16.msra.mxu0 0
        %2040 = vmatprep.subr.bf16.mxu0 0
        %2041 = vmatpush1.bf16.msra.mxu0 0
        %2042 = vmatprep.subr.bf16.mxu0 0
        %2043 = vmatpush1.bf16.msra.mxu0 0
        %2044 = vmatprep.subr.bf16.mxu0 0
        %2045 = vmatpush1.bf16.msra.mxu0 0
        %2046 = vmatprep.subr.bf16.mxu0 0
        %2047 = vmatpush1.bf16.msra.mxu0 0
        %2048 = vmatprep.subr.bf16.mxu0 0
        %2049 = vmatpush1.bf16.msra.mxu0 0
        %2050 = vmatprep.subr.bf16.mxu0 0
        %2051 = vmatpush1.bf16.msra.mxu0 0
        %2052 = vmatprep.subr.bf16.mxu0 0
        %2053 = vmatpush1.bf16.msra.mxu0 0
        %2054 = vmatprep.subr.bf16.mxu0 0
        %2055 = vmatpush1.bf16.msra.mxu0 0
        %2056 = vmatprep.mubr.bf16.mxu0 0
        %2057 = vmatmul.mubr.bf16.gmra.mrb[0].mxu0 %v601
        %v2058 = vpop.f32.mrb[0].mxu0
        %v2059 = vadd.f32 %v2014, %v2058
        %v2060 = vpop.f32.mrb[0].mxu0
        %v2061 = vpop.f32.mrb[0].mxu0
        %v2062 = vadd.f32 %v2019, %v2061
        %v2063 = vpop.f32.mrb[0].mxu0
        %2064 = vdwg.mxu0
        %v2065 = vsub.f32 0.0, %v2059
        %v2066 = vsub.f32 0.0, %v2062
        %v2067 = vmul.f32 %v2065, 1.442695
        %v2068 = vpow.pop %v2067
        %v2069 = vmul.f32 %v2066, 1.442695
        %v2070 = vpow.pop %v2069
        %v2071 = vadd.f32 %v2068, 1.0
        %v2072 = vadd.f32 %v2070, 1.0
        %v2073 = vrcp.pop %v2071
        %v2074 = vrcp.pop %v2072
        %v2075 = vpack.c.bf16 %v2074, %v2073
        %v2076 = vsel %vm368, %v1914, 0
        %2078 = vmatprep.subr.bf16.mxu0 0
        %2079 = vmatpush1.bf16.msra.mxu0 %v2075
        %2080 = vmatprep.subr.bf16.mxu0 0
        %2081 = vmatpush1.bf16.msra.mxu0 0
        %2082 = vmatprep.subr.bf16.mxu0 0
        %2083 = vmatpush1.bf16.msra.mxu0 0
        %2084 = vmatprep.subr.bf16.mxu0 0
        %2085 = vmatpush1.bf16.msra.mxu0 0
        %2086 = vmatprep.subr.bf16.mxu0 0
        %2087 = vmatpush1.bf16.msra.mxu0 0
        %2088 = vmatprep.subr.bf16.mxu0 0
        %2089 = vmatpush1.bf16.msra.mxu0 0
        %2090 = vmatprep.subr.bf16.mxu0 0
        %2091 = vmatpush1.bf16.msra.mxu0 0
        %2092 = vmatprep.subr.bf16.mxu0 0
        %2093 = vmatpush1.bf16.msra.mxu0 0
        %2094 = vmatprep.subr.bf16.mxu0 0
        %2095 = vmatpush1.bf16.msra.mxu0 0
        %2096 = vmatprep.subr.bf16.mxu0 0
        %2097 = vmatpush1.bf16.msra.mxu0 0
        %2098 = vmatprep.subr.bf16.mxu0 0
        %2099 = vmatpush1.bf16.msra.mxu0 0
        %2100 = vmatprep.subr.bf16.mxu0 0
        %2101 = vmatpush1.bf16.msra.mxu0 0
        %2102 = vmatprep.subr.bf16.mxu0 0
        %2103 = vmatpush1.bf16.msra.mxu0 0
        %2104 = vmatprep.subr.bf16.mxu0 0
        %2105 = vmatpush1.bf16.msra.mxu0 0
        %2106 = vmatprep.subr.bf16.mxu0 0
        %2107 = vmatpush1.bf16.msra.mxu0 0
        %2108 = vmatprep.subr.bf16.mxu0 0
        %2109 = vmatpush1.bf16.msra.mxu0 0
        %2110 = vmatprep.mubr.bf16.mxu0 0
        %2111 = vmatmul.mubr.bf16.gmra.mrb[0].mxu0 %v2076
        %v2112 = vpop.f32.mrb[0].mxu0
        %v2113 = vadd.f32 0.0, %v2112
        %v2114 = vpop.f32.mrb[0].mxu0
        %v2115 = vpop.f32.mrb[0].mxu0
        %v2116 = vpop.f32.mrb[0].mxu0
        %2117 = vdwg.mxu0
        %vm2118 = vcmp.gt.f32.partialorder %v2113, 0.0
        %v2119 = vmul.f32 %v2113, 0.2
        %v2120 = vsel %vm2118, %v2113, %v2119
        %v2121 = vpack.c.bf16 %v2120, %v2120
        %v2123 = vsel %vm425, %v2121, 0
        %2125 = vmatprep.subr.bf16.mxu0 0
        %2126 = vmatpush1.bf16.msra.mxu0 %v2123
        %2127 = vmatprep.subr.bf16.mxu0 0
        %2128 = vmatpush1.bf16.msra.mxu0 0
        %2129 = vmatprep.subr.bf16.mxu0 0
        %2130 = vmatpush1.bf16.msra.mxu0 0
        %2131 = vmatprep.subr.bf16.mxu0 0
        %2132 = vmatpush1.bf16.msra.mxu0 0
        %2133 = vmatprep.subr.bf16.mxu0 0
        %2134 = vmatpush1.bf16.msra.mxu0 0
        %2135 = vmatprep.subr.bf16.mxu0 0
        %2136 = vmatpush1.bf16.msra.mxu0 0
        %2137 = vmatprep.subr.bf16.mxu0 0
        %2138 = vmatpush1.bf16.msra.mxu0 0
        %2139 = vmatprep.subr.bf16.mxu0 0
        %2140 = vmatpush1.bf16.msra.mxu0 0
        %2141 = vmatprep.subr.bf16.mxu0 0
        %2142 = vmatpush1.bf16.msra.mxu0 0
        %2143 = vmatprep.subr.bf16.mxu0 0
        %2144 = vmatpush1.bf16.msra.mxu0 0
        %2145 = vmatprep.subr.bf16.mxu0 0
        %2146 = vmatpush1.bf16.msra.mxu0 0
        %2147 = vmatprep.subr.bf16.mxu0 0
        %2148 = vmatpush1.bf16.msra.mxu0 0
        %2149 = vmatprep.subr.bf16.mxu0 0
        %2150 = vmatpush1.bf16.msra.mxu0 0
        %2151 = vmatprep.subr.bf16.mxu0 0
        %2152 = vmatpush1.bf16.msra.mxu0 0
        %2153 = vmatprep.subr.bf16.mxu0 0
        %2154 = vmatpush1.bf16.msra.mxu0 0
        %2155 = vmatprep.subr.bf16.mxu0 0
        %2156 = vmatpush1.bf16.msra.mxu0 0
        %2157 = vmatprep.mubr.bf16.mxu0 0
        %2158 = vmatmul.mubr.bf16.gmra.mrb[0].mxu0 %v709
        %v2159 = vpop.f32.mrb[0].mxu0
        %v2160 = vadd.f32 %v706, %v2159
        %v2161 = vpop.f32.mrb[0].mxu0
        %v2162 = vpop.f32.mrb[0].mxu0
        %v2163 = vpop.f32.mrb[0].mxu0
        %2164 = vdwg.mxu0
        %vm2165 = vcmp.gt.f32.partialorder %v2160, 0.0
        %v2166 = vmul.f32 %v2160, 0.2
        %v2167 = vsel %vm2165, %v2160, %v2166
        %s2168 = scalar_lea.vmem %s339, 32 [#allocation5]
        %2169 = vst.msk [vmem:[%s2168] sm:$0xff] %vm368, %v2167
        %s2170 = sand.u32 %s226, 1
        %s2171 = scalar_lea.sflag [#allocation4], %s2170
        %s2172 = sand.u32 %s226, 1
        %s2173 = smul.addr %s2172, 40
        %s2174 = scalar_lea.vmem [#allocation5], %s2173
        // Predicated region
        $region61: #{tpu_custom_call.1} parent=55 // pred_check
          %p2175 = pneg %p236
        $region62: #{tpu_custom_call.1} parent=55 // pred_check_branch
          %2177 = sbr.rel (%p2175) target = $region64
        $region63: #{tpu_custom_call.1} parent=55 // pred_region
          %s2178 = smul.u32 5, %s24
          %s2180 = ssub.s32 640, 640
          %2181 = vsyncadd %s2171, %s2180
          %s2182 = smul.addr %s2178, 128
          %s2183 = scalar_lea.hbm %s9, %s2182
          %s2184 = sshll.u32 %s2174, 4
          %s2185 = int_to_ptr.vmem [resolvable:$true] %s2184
          %2190 = dma.vmem_to_hbm [thread:$0]  %s2185, 640, %s2183, %s2171, 128, 128, 8
        $region64: #{tpu_custom_call.1} parent=55 // pred_fallthru
          _
      $region56: #{tpu_custom_call.1} parent=5 // pred_fallthru
        _
      %p2191 = scmp.le.s32.totalorder 2, %s19
      // Predicated region
      $region65: #{tpu_custom_call.1} parent=5 // pred_check
        %p2192 = pneg %p2191
      $region66: #{tpu_custom_call.1} parent=5 // pred_check_branch
        %2194 = sbr.rel (%p2192) target = $region68
      $region67: #{tpu_custom_call.1} parent=5 // pred_region
        %s2195 = ssub.s32 %s19, 2
        // Predicated region
        $region69: #{tpu_custom_call.1} parent=67 // pred_check
          %p2196 = pneg %p242
        $region70: #{tpu_custom_call.1} parent=67 // pred_check_branch
          %2198 = sbr.rel (%p2196) target = $region72
        $region71: #{tpu_custom_call.1} parent=67 // pred_region
          %s2199 = sand.u32 %s227, 1
          %s2200 = scalar_lea.sflag [#allocation4], %s2199
          %s2201 = sand.u32 %s227, 1
          %s2202 = smul.addr %s2201, 40
          %s2203 = scalar_lea.vmem [#allocation5], %s2202
          %2204 = dma.done %s2200, 640
        $region72: #{tpu_custom_call.1} parent=67 // pred_fallthru
          _
      $region68: #{tpu_custom_call.1} parent=5 // pred_fallthru
        _
    $region6: #{tpu_custom_call.1} parent=1 // loop_footer
      %s23 = sadd.s32 1, %s19
    $region7: #{tpu_custom_call.1} parent=1 // loop_footer_branch
      %18 = sbr.rel target = $region3
    $region8: #{tpu_custom_call.1} parent=1 // loop_exit
      _
    %2205 = vsyncpa [#allocation3], 1
    %s2206 = scalar_lea.sflag [#allocation3], 1
    %2207 = vsyncpa %s2206, 1
    %2208 = vsyncpa [#allocation4], 1
    %s2209 = scalar_lea.sflag [#allocation4], 1
    %2210 = vsyncpa %s2209, 1

</llo_original>
